<compile_context>
chip_gen: v7x
topology: tpu7x:2x2x1
jax: 0.10.0
libtpu: 0.0.40
codegen_flags: <defaults>
</compile_context>

<pallas_src>
import jax
import jax.numpy as jnp
from jax.experimental import pallas as pl
from jax.experimental.pallas import tpu as pltpu


def _transpose_kernel(x_ref, o_ref):
    # x_ref: (tS, tD) VMEM tile, o_ref: (tD, tS) VMEM tile.
    # Pure 2-D transpose -> XLU transpose over (8,128) vreg tiles.
    o_ref[...] = x_ref[...].T


def _vmem_config():
    """Return (per-tile byte budget, vmem_limit_bytes), generation-aware.

    v5e/v6e have 128 MiB physical VMEM -> larger tiles + raised scoped limit.
    v7x has 64 MiB physical (32 MiB scoped default) -> stay conservative so
    input+output double-buffering (~4x tile bytes) always fits.
    """
    vmem_capacity = None
    try:
        vmem_capacity = getattr(pltpu.get_tpu_info(), "vmem_capacity_bytes", None)
    except Exception:
        vmem_capacity = None
    if vmem_capacity is not None and vmem_capacity >= 96 * 1024 * 1024:
        return 4 * 1024 * 1024, 64 * 1024 * 1024  # v5e / v6e
    return 2 * 1024 * 1024, 32 * 1024 * 1024      # v7x or unknown


def _shrink_to_128_multiple(t):
    """Next smaller legal block size: largest 128-multiple strictly below t."""
    if t <= 128:
        return t
    if t % 128 == 0:
        return t - 128
    return (t // 128) * 128


def _pick_tiles(S, D, itemsize, tile_bytes_budget):
    """Pick (tS, tD) for the transpose tiles.

    Prefer full extents (always legal block dims, no edge blocks); when the
    slab exceeds the per-buffer budget, greedily shrink the larger axis to
    128-multiples.  Non-dividing tiles are fine: Pallas clips edge blocks
    (correct, just slightly less efficient on the last block).
    """
    tS, tD = S, D
    while tS * tD * itemsize > tile_bytes_budget and (tS > 128 or tD > 128):
        if tS >= tD and tS > 128:
            tS = _shrink_to_128_multiple(tS)
        elif tD > 128:
            tD = _shrink_to_128_multiple(tD)
        else:
            tS = _shrink_to_128_multiple(tS)
    return tS, tD


def transpose12(x):
    """Pallas equivalent of torch Transpose(1, 2)(x) for a 3-D tensor."""
    B, S, D = x.shape
    itemsize = x.dtype.itemsize

    # Small-shape / narrow-lane dispatch: output lane dim (S) or input lane
    # dim (D) below 128 forces masked partial loads/stores, and tiny tensors
    # are dominated by launch + DMA-setup overhead.  Plain swapaxes wins.
    if S < 128 or D < 128 or B * S * D * itemsize < 256 * 1024:
        return jnp.swapaxes(x, 1, 2)

    tile_budget, vmem_limit = _vmem_config()
    tS, tD = _pick_tiles(S, D, itemsize, tile_budget)
    nS = pl.cdiv(S, tS)
    nD = pl.cdiv(D, tD)

    # Innermost grid axis walks the output's lane (S) dimension so writeback
    # DMAs stream contiguously through the (B, D, S) output.  Outermost axis
    # is whichever of (B, D-tiles) is larger so the v7x megacore split gets
    # balanced work even when B == 1.
    if B >= nD:
        grid = (B, nD, nS)
        in_map = lambda b, d, s: (b, s, d)
        out_map = lambda b, d, s: (b, d, s)
    else:
        grid = (nD, B, nS)
        in_map = lambda d, b, s: (b, s, d)
        out_map = lambda d, b, s: (b, d, s)

    return pl.pallas_call(
        _transpose_kernel,
        out_shape=jax.ShapeDtypeStruct((B, D, S), x.dtype),
        grid=grid,
        in_specs=[
            pl.BlockSpec((pl.Squeezed(), tS, tD), in_map),
        ],
        out_specs=pl.BlockSpec((pl.Squeezed(), tD, tS), out_map),
        compiler_params=pltpu.CompilerParams(
            dimension_semantics=("parallel", "parallel", "parallel"),
            vmem_limit_bytes=vmem_limit,
        ),
        cost_estimate=pl.CostEstimate(
            flops=0,
            transcendentals=0,
            bytes_accessed=2 * B * S * D * itemsize,
        ),
    )(x)


class Transpose:
    """Mirror of PatchTST utils.Transpose; Pallas path for dims (1, 2) on 3-D inputs."""

    def __init__(self, *dims, contiguous=False):
        self.dims = dims
        self.contiguous = contiguous  # no-op in JAX (outputs are contiguous)

    def __call__(self, x):
        d0, d1 = sorted(d % x.ndim for d in self.dims)
        if x.ndim == 3 and (d0, d1) == (1, 2):
            return transpose12(x)
        # TODO(synk): general N-D / other-axis transpose falls back to plain JAX.
        return jnp.swapaxes(x, self.dims[0], self.dims[1])


if __name__ == "__main__":
    root = jax.random.PRNGKey(0)
    k_small, k_big, k_bf16 = jax.random.split(root, 3)
    mod = Transpose(1, 2, contiguous=True)

    # PatchTST-style small activation: (batch, seq_len, d_model).
    # Hits the small-shape fallback (S=8 < 128) on purpose.
    B, S, D = 2, 8, 32
    x_small = jax.random.normal(k_small, (B, S, D), dtype=jnp.float32)
    y_small = jax.block_until_ready(mod(x_small))
    assert y_small.shape == (B, D, S), y_small.shape
    assert y_small.dtype == x_small.dtype
    assert jnp.array_equal(y_small, jnp.swapaxes(x_small, 1, 2)), "small-shape mismatch"

    # Larger f32 shape exercising the tiled Pallas path with a non-dividing
    # D: full-extent tD=640, tS = 768 (v7x budget) or 1024 (v5e/v6e budget).
    B2, S2, D2 = 2, 1024, 640
    x_big = jax.random.normal(k_big, (B2, S2, D2), dtype=jnp.float32)
    y_big = jax.block_until_ready(mod(x_big))
    assert y_big.shape == (B2, D2, S2), y_big.shape
    assert jnp.array_equal(y_big, jnp.swapaxes(x_big, 1, 2)), "tiled-path mismatch"

    # bf16 path: dtype-aware byte budget lets the whole slab be one block.
    B3, S3, D3 = 1, 512, 384
    x_bf16 = jax.random.normal(k_bf16, (B3, S3, D3), dtype=jnp.bfloat16)
    y_bf16 = jax.block_until_ready(mod(x_bf16))
    assert y_bf16.shape == (B3, D3, S3), y_bf16.shape
    assert jnp.array_equal(y_bf16, jnp.swapaxes(x_bf16, 1, 2)), "bf16-path mismatch"

    print("KERNEL_OK")
</pallas_src>

<mosaic_0001>
module attributes {stable_mosaic.version = 11 : i64} {
  func.func @_transpose_kernel(%arg0: i32, %arg1: i32, %arg2: i32, %arg3: memref<1x768x640xf32, #tpu.memory_space<vmem>>, %arg4: memref<1x640x768xf32, #tpu.memory_space<vmem>>) attributes {dimension_semantics = [#tpu.dimension_semantics<parallel>, #tpu.dimension_semantics<parallel>, #tpu.dimension_semantics<parallel>], iteration_bounds = array<i64: 2, 1, 2>, scalar_prefetch = 0 : i64, scratch_operands = 0 : i64, tpu.core_type = #tpu.core_type<tc>, window_params = [{transform_indices = @transform_0, window_bounds = array<i64: 1, 768, 640>}, {transform_indices = @transform_1, window_bounds = array<i64: 1, 640, 768>}]} {
    %c0 = arith.constant 0 : index
    %c0_0 = arith.constant 0 : index
    %c0_1 = arith.constant 0 : index
    %0 = vector.load %arg3[%c0, %c0_0, %c0_1] : memref<1x768x640xf32, #tpu.memory_space<vmem>>, vector<1x768x640xf32>
    %1 = vector.shape_cast %0 : vector<1x768x640xf32> to vector<768x640xf32>
    %2 = tpu.transpose %1, [1, 0] : vector<768x640xf32> -> vector<640x768xf32>
    %c0_2 = arith.constant 0 : index
    %c0_3 = arith.constant 0 : index
    %c0_4 = arith.constant 0 : index
    %3 = vector.load %arg4[%c0_2, %c0_3, %c0_4] : memref<1x640x768xf32, #tpu.memory_space<vmem>>, vector<1x640x768xf32>
    %4 = vector.shape_cast %3 : vector<1x640x768xf32> to vector<640x768xf32>
    %5 = vector.shape_cast %2 : vector<640x768xf32> to vector<1x640x768xf32>
    tpu.vector_store %arg4[%c0_2, %c0_3, %c0_4], %5 {strides = array<i32>} : memref<1x640x768xf32, #tpu.memory_space<vmem>>, vector<1x640x768xf32>,
    return
  }
  func.func @transform_0(%arg0: i32, %arg1: i32, %arg2: i32) -> (i32, i32, i32) {
    %c0_i32 = arith.constant 0 : i32
    return %arg0, %arg2, %arg1 : i32, i32, i32
  }
  func.func @transform_1(%arg0: i32, %arg1: i32, %arg2: i32) -> (i32, i32, i32) {
    %c0_i32 = arith.constant 0 : i32
    return %arg0, %arg1, %arg2 : i32, i32, i32
  }
}

</mosaic_0001>

<llo_original>
// kernel: tpu_custom_call.1
$region0: #{tpu_custom_call.1}
  #allocation0 [shape = 'u32[]', space=smem, size = 0x4, offset = 0x4, fixed_abs, tag = 'smem constant byte address 0x4 - core index']
  #allocation1 [shape = 'u32[144,128]{1,0:T(1,128)}', space=vmem, size = 0x12000, scoped, tag = 'internal scratch']
  %s0 = inlined_call_operand.hbm [shape: f32[2,1024,640], index: 0, kind: input, shape index: {}]
  %s1 = inlined_call_operand.hbm [shape: f32[2,640,1024], index: 1, kind: output, shape index: {}]
  %s2 = sld [smem:[#allocation0]]
  $region41: #{tpu_custom_call.1} parent=0
    _
  %s4 = ssub.s32 1, %s2
  %s5 = scalar_select 0, %s4, %s2
  $region1: #{tpu_custom_call.1} parent=0
    #allocation2 [shape = 'u8[3932160]{0}', space=vmem, size = 0x3c0000, scoped, tag = 'input window, operand 0']
    #allocation3 [shape = 's32[2]{0}', space=sflag, size = 0x8, scoped, tag = 'scoped memory for tpu_custom_call.1']
    #allocation4 [shape = 's32[2]{0}', space=sflag, size = 0x8, scoped, tag = 'scoped memory for tpu_custom_call.1']
    #allocation5 [shape = 'u8[3932160]{0}', space=vmem, size = 0x3c0000, scoped, tag = 'output window, operand 0']
    %6 = vsyncpa [#allocation3], 0
    %s7 = scalar_lea.sflag [#allocation3], 1
    %8 = vsyncpa %s7, 0
    %9 = vsyncpa [#allocation4], 0
    %s10 = scalar_lea.sflag [#allocation4], 1
    %11 = vsyncpa %s10, 0
    loop: start=0, step=1, limit=6
    $region2: #{tpu_custom_call.1} parent=1 // loop_pre_header
      _
    $region3: #{tpu_custom_call.1} parent=1 // loop_header
      %s13 = sphi 0, %s17
      %p14 = scmp.ge.s32.totalorder %s13, 6
      %s20 = sphi 0, %s39
      %s21 = sphi 0, %s35
      %s22 = sphi 0, %s31
      %s23 = sphi 0, %s20
      %s24 = sphi 0, %s21
      %s25 = sphi 0, %s22
      %s26 = sphi 0, %s23
      %s27 = sphi 0, %s24
      %s28 = sphi 0, %s25
      %s46 = sphi 0, %s48
      %s49 = sphi 0, %s46
      %s50 = sphi 0, %s49
      %s66 = sphi 0, %s50
      %s76 = sphi 0, %s78
      %s79 = sphi 0, %s76
      %s80 = sphi 0, %s79
      %s96 = sphi 0, %s80
    $region4: #{tpu_custom_call.1} parent=1 // loop_header_branch
      %16 = sbr.rel (%p14) target = $region8
    $region5: #{tpu_custom_call.1} parent=1 // loop_body
      %s18 = ssub.s32 %s13, 1
      %s19 = ssub.s32 %s13, 2
      %s29 = sadd.s32 1, %s22
      %p30 = scmp.ge.s32.totalorder %s29, 2
      %s31 = scalar_select %p30, 0, %s29
      %s32 = sadd.s32 1, %s21
      %s33 = scalar_select %p30, %s32, %s21
      %p34 = scmp.ge.s32.totalorder %s33, 1
      %s35 = scalar_select %p34, 0, %s33
      %s36 = sadd.s32 1, %s20
      %s37 = scalar_select %p34, %s36, %s20
      %p38 = scmp.ge.s32.totalorder %s37, 2
      %s39 = scalar_select %p38, 0, %s37
      %s40 = ssub.s32 %s20, %s39
      %s41 = ssub.s32 %s22, %s31
      %s42 = sor.u32 %s40, %s41
      %s43 = ssub.s32 %s21, %s35
      %s44 = sor.u32 %s42, %s43
      %p45 = scmp.eq.s32.totalorder %s44, 0
      %s47 = sadd.s32 %s46, 1
      %s48 = scalar_select %p45, %s46, %s47
      %p51 = pneg %p45
      %p52 = scmp.eq.s32.totalorder %s13, 3
      %p53 = por %p51, %p52
      %p54 = scmp.ne.s32.totalorder %s46, %s49
      %p55 = scmp.eq.s32.totalorder %s13, 0
      %p56 = por %p54, %p55
      %p57 = scmp.ne.s32.totalorder %s46, %s49
      %p58 = scmp.eq.s32.totalorder %s18, 3
      %p59 = por %p57, %p58
      %p60 = scmp.ne.s32.totalorder %s49, %s50
      %p61 = scmp.eq.s32.totalorder %s18, 0
      %p62 = por %p60, %p61
      %p63 = scmp.ne.s32.totalorder %s49, %s50
      %p64 = scmp.eq.s32.totalorder %s19, 3
      %p65 = por %p63, %p64
      %p67 = scmp.ne.s32.totalorder %s50, %s66
      %p68 = scmp.eq.s32.totalorder %s19, 0
      %p69 = por %p67, %p68
      %s70 = ssub.s32 %s20, %s39
      %s71 = ssub.s32 %s21, %s35
      %s72 = sor.u32 %s70, %s71
      %s73 = ssub.s32 %s22, %s31
      %s74 = sor.u32 %s72, %s73
      %p75 = scmp.eq.s32.totalorder %s74, 0
      %s77 = sadd.s32 %s76, 1
      %s78 = scalar_select %p75, %s76, %s77
      %p81 = pneg %p75
      %p82 = scmp.eq.s32.totalorder %s13, 3
      %p83 = por %p81, %p82
      %p84 = scmp.ne.s32.totalorder %s76, %s79
      %p85 = scmp.eq.s32.totalorder %s13, 0
      %p86 = por %p84, %p85
      %p87 = scmp.ne.s32.totalorder %s76, %s79
      %p88 = scmp.eq.s32.totalorder %s18, 3
      %p89 = por %p87, %p88
      %p90 = scmp.ne.s32.totalorder %s79, %s80
      %p91 = scmp.eq.s32.totalorder %s18, 0
      %p92 = por %p90, %p91
      %p93 = scmp.ne.s32.totalorder %s79, %s80
      %p94 = scmp.eq.s32.totalorder %s19, 3
      %p95 = por %p93, %p94
      %p97 = scmp.ne.s32.totalorder %s80, %s96
      %p98 = scmp.eq.s32.totalorder %s19, 0
      %p99 = por %p97, %p98
      %p100 = scmp.le.s32.totalorder 1, %s13
      %p101 = scmp.lt.s32.totalorder %s13, 5
      %p102 = pnand %p100, %p101
      %p103 = pneg %p102
      // Predicated region
      $region9: #{tpu_custom_call.1} parent=5 // pred_check
        _
      $region10: #{tpu_custom_call.1} parent=5 // pred_check_branch
        %105 = sbr.rel (%p102) target = $region12
      $region11: #{tpu_custom_call.1} parent=5 // pred_region
        %s106 = ssub.s32 %s13, 1
      $region12: #{tpu_custom_call.1} parent=5 // pred_fallthru
        _
      %p107 = scmp.lt.s32.totalorder %s13, 4
      // Predicated region
      $region13: #{tpu_custom_call.1} parent=5 // pred_check
        %p108 = pneg %p107
      $region14: #{tpu_custom_call.1} parent=5 // pred_check_branch
        %110 = sbr.rel (%p108) target = $region16
      $region15: #{tpu_custom_call.1} parent=5 // pred_region
        // Predicated region
        $region17: #{tpu_custom_call.1} parent=15 // pred_check
          %p111 = pneg %p56
        $region18: #{tpu_custom_call.1} parent=15 // pred_check_branch
          %113 = sbr.rel (%p111) target = $region20
        $region19: #{tpu_custom_call.1} parent=15 // pred_region
          %s114 = sand.u32 %s46, 1
          %s115 = scalar_lea.sflag [#allocation3], %s114
          %s116 = sand.u32 %s46, 1
          %s117 = smul.addr %s116, 3840
          %s118 = scalar_lea.vmem [#allocation2], %s117
          %s119 = smul.u32 96, %s22
          %s120 = smul.u32 5, %s21
          %s121 = ssub.s32 128, %s119
          %p122 = scmp.lt.s32.totalorder %s121, 96
          %s123 = scalar_select %p122, %s121, 96
          %s124 = smul.u32 128, %s123
          %s125 = smul.u32 %s124, 5
          %s127 = ssub.s32 61440, %s125
          %128 = vsyncadd %s115, %s127
          %p129 = scmp.ne.s32.totalorder 0, %s125
          %s130 = smul.addr %s119, 5
          %s131 = sadd.s32 %s120, %s130
          %s132 = smul.addr %s20, 640
          %s133 = sadd.s32 %s131, %s132
          %s134 = smul.addr %s133, 128
          %s135 = scalar_lea.hbm %s0, %s134
          %s136 = smul.u32 40, %s123
          %s137 = sshll.u32 %s118, 4
          %s138 = int_to_ptr.vmem [resolvable:$true] %s137
          %s139 = sshll.u32 %s136, 4
          %143 = dma.hbm_to_vmem [thread:$0]  (%p129), %s135, %s139, %s138, %s115, 640, 640, 40
        $region20: #{tpu_custom_call.1} parent=15 // pred_fallthru
          _
      $region16: #{tpu_custom_call.1} parent=5 // pred_fallthru
        _
      %p144 = scmp.le.s32.totalorder 1, %s13
      %p145 = scmp.lt.s32.totalorder %s13, 5
      %p146 = pnand %p144, %p145
      %p147 = pneg %p146
      // Predicated region
      $region21: #{tpu_custom_call.1} parent=5 // pred_check
        _
      $region22: #{tpu_custom_call.1} parent=5 // pred_check_branch
        %149 = sbr.rel (%p146) target = $region24
      $region23: #{tpu_custom_call.1} parent=5 // pred_region
        %s150 = ssub.s32 %s13, 1
        %s151 = sand.u32 %s49, 1
        %s152 = scalar_lea.sflag [#allocation3], %s151
        %s153 = sand.u32 %s49, 1
        %s154 = smul.addr %s153, 3840
        %s155 = scalar_lea.vmem [#allocation2], %s154
        // Predicated region
        $region25: #{tpu_custom_call.1} parent=23 // pred_check
          %p156 = pneg %p62
        $region26: #{tpu_custom_call.1} parent=23 // pred_check_branch
          %158 = sbr.rel (%p156) target = $region28
        $region27: #{tpu_custom_call.1} parent=23 // pred_region
          %159 = dma.done %s152, 61440
        $region28: #{tpu_custom_call.1} parent=23 // pred_fallthru
          _
        %s160 = sand.u32 %s49, 1
        %s161 = scalar_lea.sflag [#allocation3], %s160
        %s162 = sand.u32 %s49, 1
        %s163 = smul.addr %s162, 3840
        %s164 = scalar_lea.vmem [#allocation2], %s163
        %p165 = pneg %p62
        %p166 = pneg %p59
        %p167 = pneg %p92
        %p168 = pneg %p89
        %s169 = sand.u32 %s79, 1
        %s170 = scalar_lea.sflag [#allocation4], %s169
        %s171 = sand.u32 %s79, 1
        %s172 = smul.addr %s171, 3840
        %s173 = scalar_lea.vmem [#allocation5], %s172
        %s174 = smul.u32 96, %s25
        %s175 = smul.u32 5, %s24
        %s176 = ssub.s32 128, %s174
        %p177 = scmp.lt.s32.totalorder %s176, 96
        %s178 = scalar_select %p177, %s176, 96
        %s179 = smul.u32 128, %s178
        %s180 = smul.u32 %s179, 5
        %s181 = smul.u32 80, %s24
        %s182 = smul.u32 6, %s25
        %s183 = ssub.s32 8, %s182
        %p184 = scmp.lt.s32.totalorder %s183, 6
        %s185 = scalar_select %p184, %s183, 6
        %s186 = smul.u32 10240, %s185
        %v187 = vld [vmem:[%s155] sm:$0xff]
        %v188 = vld [vmem:[%s155 + $0x8] sm:$0xff]
        %v189 = vld [vmem:[%s155 + $0x10] sm:$0xff]
        %v190 = vld [vmem:[%s155 + $0x18] sm:$0xff]
        %v191 = vld [vmem:[%s155 + $0x20] sm:$0xff]
        %v192 = vld [vmem:[%s155 + $0x28] sm:$0xff]
        %v193 = vld [vmem:[%s155 + $0x30] sm:$0xff]
        %v194 = vld [vmem:[%s155 + $0x38] sm:$0xff]
        %v195 = vld [vmem:[%s155 + $0x40] sm:$0xff]
        %v196 = vld [vmem:[%s155 + $0x48] sm:$0xff]
        %v197 = vld [vmem:[%s155 + $0x50] sm:$0xff]
        %v198 = vld [vmem:[%s155 + $0x58] sm:$0xff]
        %v199 = vld [vmem:[%s155 + $0x60] sm:$0xff]
        %v200 = vld [vmem:[%s155 + $0x68] sm:$0xff]
        %v201 = vld [vmem:[%s155 + $0x70] sm:$0xff]
        %v202 = vld [vmem:[%s155 + $0x78] sm:$0xff]
        %v203 = vld [vmem:[%s155 + $0x80] sm:$0xff]
        %v204 = vld [vmem:[%s155 + $0x88] sm:$0xff]
        %v205 = vld [vmem:[%s155 + $0x90] sm:$0xff]
        %v206 = vld [vmem:[%s155 + $0x98] sm:$0xff]
        %v207 = vld [vmem:[%s155 + $0xa0] sm:$0xff]
        %v208 = vld [vmem:[%s155 + $0xa8] sm:$0xff]
        %v209 = vld [vmem:[%s155 + $0xb0] sm:$0xff]
        %v210 = vld [vmem:[%s155 + $0xb8] sm:$0xff]
        %v211 = vld [vmem:[%s155 + $0xc0] sm:$0xff]
        %v212 = vld [vmem:[%s155 + $0xc8] sm:$0xff]
        %v213 = vld [vmem:[%s155 + $0xd0] sm:$0xff]
        %v214 = vld [vmem:[%s155 + $0xd8] sm:$0xff]
        %v215 = vld [vmem:[%s155 + $0xe0] sm:$0xff]
        %v216 = vld [vmem:[%s155 + $0xe8] sm:$0xff]
        %v217 = vld [vmem:[%s155 + $0xf0] sm:$0xff]
        %v218 = vld [vmem:[%s155 + $0xf8] sm:$0xff]
        %v219 = vld [vmem:[%s155 + $0x100] sm:$0xff]
        %v220 = vld [vmem:[%s155 + $0x108] sm:$0xff]
        %v221 = vld [vmem:[%s155 + $0x110] sm:$0xff]
        %v222 = vld [vmem:[%s155 + $0x118] sm:$0xff]
        %v223 = vld [vmem:[%s155 + $0x120] sm:$0xff]
        %v224 = vld [vmem:[%s155 + $0x128] sm:$0xff]
        %v225 = vld [vmem:[%s155 + $0x130] sm:$0xff]
        %v226 = vld [vmem:[%s155 + $0x138] sm:$0xff]
        %v227 = vld [vmem:[%s155 + $0x140] sm:$0xff]
        %v228 = vld [vmem:[%s155 + $0x148] sm:$0xff]
        %v229 = vld [vmem:[%s155 + $0x150] sm:$0xff]
        %v230 = vld [vmem:[%s155 + $0x158] sm:$0xff]
        %v231 = vld [vmem:[%s155 + $0x160] sm:$0xff]
        %v232 = vld [vmem:[%s155 + $0x168] sm:$0xff]
        %v233 = vld [vmem:[%s155 + $0x170] sm:$0xff]
        %v234 = vld [vmem:[%s155 + $0x178] sm:$0xff]
        %v235 = vld [vmem:[%s155 + $0x180] sm:$0xff]
        %v236 = vld [vmem:[%s155 + $0x188] sm:$0xff]
        %v237 = vld [vmem:[%s155 + $0x190] sm:$0xff]
        %v238 = vld [vmem:[%s155 + $0x198] sm:$0xff]
        %v239 = vld [vmem:[%s155 + $0x1a0] sm:$0xff]
        %v240 = vld [vmem:[%s155 + $0x1a8] sm:$0xff]
        %v241 = vld [vmem:[%s155 + $0x1b0] sm:$0xff]
        %v242 = vld [vmem:[%s155 + $0x1b8] sm:$0xff]
        %v243 = vld [vmem:[%s155 + $0x1c0] sm:$0xff]
        %v244 = vld [vmem:[%s155 + $0x1c8] sm:$0xff]
        %v245 = vld [vmem:[%s155 + $0x1d0] sm:$0xff]
        %v246 = vld [vmem:[%s155 + $0x1d8] sm:$0xff]
        %v247 = vld [vmem:[%s155 + $0x1e0] sm:$0xff]
        %v248 = vld [vmem:[%s155 + $0x1e8] sm:$0xff]
        %v249 = vld [vmem:[%s155 + $0x1f0] sm:$0xff]
        %v250 = vld [vmem:[%s155 + $0x1f8] sm:$0xff]
        %v251 = vld [vmem:[%s155 + $0x200] sm:$0xff]
        %v252 = vld [vmem:[%s155 + $0x208] sm:$0xff]
        %v253 = vld [vmem:[%s155 + $0x210] sm:$0xff]
        %v254 = vld [vmem:[%s155 + $0x218] sm:$0xff]
        %v255 = vld [vmem:[%s155 + $0x220] sm:$0xff]
        %v256 = vld [vmem:[%s155 + $0x228] sm:$0xff]
        %v257 = vld [vmem:[%s155 + $0x230] sm:$0xff]
        %v258 = vld [vmem:[%s155 + $0x238] sm:$0xff]
        %v259 = vld [vmem:[%s155 + $0x240] sm:$0xff]
        %v260 = vld [vmem:[%s155 + $0x248] sm:$0xff]
        %v261 = vld [vmem:[%s155 + $0x250] sm:$0xff]
        %v262 = vld [vmem:[%s155 + $0x258] sm:$0xff]
        %v263 = vld [vmem:[%s155 + $0x260] sm:$0xff]
        %v264 = vld [vmem:[%s155 + $0x268] sm:$0xff]
        %v265 = vld [vmem:[%s155 + $0x270] sm:$0xff]
        %v266 = vld [vmem:[%s155 + $0x278] sm:$0xff]
        %v267 = vld [vmem:[%s155 + $0x280] sm:$0xff]
        %v268 = vld [vmem:[%s155 + $0x288] sm:$0xff]
        %v269 = vld [vmem:[%s155 + $0x290] sm:$0xff]
        %v270 = vld [vmem:[%s155 + $0x298] sm:$0xff]
        %v271 = vld [vmem:[%s155 + $0x2a0] sm:$0xff]
        %v272 = vld [vmem:[%s155 + $0x2a8] sm:$0xff]
        %v273 = vld [vmem:[%s155 + $0x2b0] sm:$0xff]
        %v274 = vld [vmem:[%s155 + $0x2b8] sm:$0xff]
        %v275 = vld [vmem:[%s155 + $0x2c0] sm:$0xff]
        %v276 = vld [vmem:[%s155 + $0x2c8] sm:$0xff]
        %v277 = vld [vmem:[%s155 + $0x2d0] sm:$0xff]
        %v278 = vld [vmem:[%s155 + $0x2d8] sm:$0xff]
        %v279 = vld [vmem:[%s155 + $0x2e0] sm:$0xff]
        %v280 = vld [vmem:[%s155 + $0x2e8] sm:$0xff]
        %v281 = vld [vmem:[%s155 + $0x2f0] sm:$0xff]
        %v282 = vld [vmem:[%s155 + $0x2f8] sm:$0xff]
        %v283 = vld [vmem:[%s155 + $0x300] sm:$0xff]
        %v284 = vld [vmem:[%s155 + $0x308] sm:$0xff]
        %v285 = vld [vmem:[%s155 + $0x310] sm:$0xff]
        %v286 = vld [vmem:[%s155 + $0x318] sm:$0xff]
        %v287 = vld [vmem:[%s155 + $0x320] sm:$0xff]
        %v288 = vld [vmem:[%s155 + $0x328] sm:$0xff]
        %v289 = vld [vmem:[%s155 + $0x330] sm:$0xff]
        %v290 = vld [vmem:[%s155 + $0x338] sm:$0xff]
        %v291 = vld [vmem:[%s155 + $0x340] sm:$0xff]
        %v292 = vld [vmem:[%s155 + $0x348] sm:$0xff]
        %v293 = vld [vmem:[%s155 + $0x350] sm:$0xff]
        %v294 = vld [vmem:[%s155 + $0x358] sm:$0xff]
        %v295 = vld [vmem:[%s155 + $0x360] sm:$0xff]
        %v296 = vld [vmem:[%s155 + $0x368] sm:$0xff]
        %v297 = vld [vmem:[%s155 + $0x370] sm:$0xff]
        %v298 = vld [vmem:[%s155 + $0x378] sm:$0xff]
        %v299 = vld [vmem:[%s155 + $0x380] sm:$0xff]
        %v300 = vld [vmem:[%s155 + $0x388] sm:$0xff]
        %v301 = vld [vmem:[%s155 + $0x390] sm:$0xff]
        %v302 = vld [vmem:[%s155 + $0x398] sm:$0xff]
        %v303 = vld [vmem:[%s155 + $0x3a0] sm:$0xff]
        %v304 = vld [vmem:[%s155 + $0x3a8] sm:$0xff]
        %v305 = vld [vmem:[%s155 + $0x3b0] sm:$0xff]
        %v306 = vld [vmem:[%s155 + $0x3b8] sm:$0xff]
        %v307 = vld [vmem:[%s155 + $0x3c0] sm:$0xff]
        %v308 = vld [vmem:[%s155 + $0x3c8] sm:$0xff]
        %v309 = vld [vmem:[%s155 + $0x3d0] sm:$0xff]
        %v310 = vld [vmem:[%s155 + $0x3d8] sm:$0xff]
        %v311 = vld [vmem:[%s155 + $0x3e0] sm:$0xff]
        %v312 = vld [vmem:[%s155 + $0x3e8] sm:$0xff]
        %v313 = vld [vmem:[%s155 + $0x3f0] sm:$0xff]
        %v314 = vld [vmem:[%s155 + $0x3f8] sm:$0xff]
        %v315 = vld [vmem:[%s155 + $0x400] sm:$0xff]
        %v316 = vld [vmem:[%s155 + $0x408] sm:$0xff]
        %v317 = vld [vmem:[%s155 + $0x410] sm:$0xff]
        %v318 = vld [vmem:[%s155 + $0x418] sm:$0xff]
        %v319 = vld [vmem:[%s155 + $0x420] sm:$0xff]
        %v320 = vld [vmem:[%s155 + $0x428] sm:$0xff]
        %v321 = vld [vmem:[%s155 + $0x430] sm:$0xff]
        %v322 = vld [vmem:[%s155 + $0x438] sm:$0xff]
        %v323 = vld [vmem:[%s155 + $0x440] sm:$0xff]
        %v324 = vld [vmem:[%s155 + $0x448] sm:$0xff]
        %v325 = vld [vmem:[%s155 + $0x450] sm:$0xff]
        %v326 = vld [vmem:[%s155 + $0x458] sm:$0xff]
        %v327 = vld [vmem:[%s155 + $0x460] sm:$0xff]
        %v328 = vld [vmem:[%s155 + $0x468] sm:$0xff]
        %v329 = vld [vmem:[%s155 + $0x470] sm:$0xff]
        %v330 = vld [vmem:[%s155 + $0x478] sm:$0xff]
        %v331 = vld [vmem:[%s155 + $0x480] sm:$0xff]
        %v332 = vld [vmem:[%s155 + $0x488] sm:$0xff]
        %v333 = vld [vmem:[%s155 + $0x490] sm:$0xff]
        %v334 = vld [vmem:[%s155 + $0x498] sm:$0xff]
        %v335 = vld [vmem:[%s155 + $0x4a0] sm:$0xff]
        %v336 = vld [vmem:[%s155 + $0x4a8] sm:$0xff]
        %v337 = vld [vmem:[%s155 + $0x4b0] sm:$0xff]
        %v338 = vld [vmem:[%s155 + $0x4b8] sm:$0xff]
        %v339 = vld [vmem:[%s155 + $0x4c0] sm:$0xff]
        %v340 = vld [vmem:[%s155 + $0x4c8] sm:$0xff]
        %v341 = vld [vmem:[%s155 + $0x4d0] sm:$0xff]
        %v342 = vld [vmem:[%s155 + $0x4d8] sm:$0xff]
        %v343 = vld [vmem:[%s155 + $0x4e0] sm:$0xff]
        %v344 = vld [vmem:[%s155 + $0x4e8] sm:$0xff]
        %v345 = vld [vmem:[%s155 + $0x4f0] sm:$0xff]
        %v346 = vld [vmem:[%s155 + $0x4f8] sm:$0xff]
        %v347 = vld [vmem:[%s155 + $0x500] sm:$0xff]
        %v348 = vld [vmem:[%s155 + $0x508] sm:$0xff]
        %v349 = vld [vmem:[%s155 + $0x510] sm:$0xff]
        %v350 = vld [vmem:[%s155 + $0x518] sm:$0xff]
        %v351 = vld [vmem:[%s155 + $0x520] sm:$0xff]
        %v352 = vld [vmem:[%s155 + $0x528] sm:$0xff]
        %v353 = vld [vmem:[%s155 + $0x530] sm:$0xff]
        %v354 = vld [vmem:[%s155 + $0x538] sm:$0xff]
        %v355 = vld [vmem:[%s155 + $0x540] sm:$0xff]
        %v356 = vld [vmem:[%s155 + $0x548] sm:$0xff]
        %v357 = vld [vmem:[%s155 + $0x550] sm:$0xff]
        %v358 = vld [vmem:[%s155 + $0x558] sm:$0xff]
        %v359 = vld [vmem:[%s155 + $0x560] sm:$0xff]
        %v360 = vld [vmem:[%s155 + $0x568] sm:$0xff]
        %v361 = vld [vmem:[%s155 + $0x570] sm:$0xff]
        %v362 = vld [vmem:[%s155 + $0x578] sm:$0xff]
        %v363 = vld [vmem:[%s155 + $0x580] sm:$0xff]
        %v364 = vld [vmem:[%s155 + $0x588] sm:$0xff]
        %v365 = vld [vmem:[%s155 + $0x590] sm:$0xff]
        %v366 = vld [vmem:[%s155 + $0x598] sm:$0xff]
        %v367 = vld [vmem:[%s155 + $0x5a0] sm:$0xff]
        %v368 = vld [vmem:[%s155 + $0x5a8] sm:$0xff]
        %v369 = vld [vmem:[%s155 + $0x5b0] sm:$0xff]
        %v370 = vld [vmem:[%s155 + $0x5b8] sm:$0xff]
        %v371 = vld [vmem:[%s155 + $0x5c0] sm:$0xff]
        %v372 = vld [vmem:[%s155 + $0x5c8] sm:$0xff]
        %v373 = vld [vmem:[%s155 + $0x5d0] sm:$0xff]
        %v374 = vld [vmem:[%s155 + $0x5d8] sm:$0xff]
        %v375 = vld [vmem:[%s155 + $0x5e0] sm:$0xff]
        %v376 = vld [vmem:[%s155 + $0x5e8] sm:$0xff]
        %v377 = vld [vmem:[%s155 + $0x5f0] sm:$0xff]
        %v378 = vld [vmem:[%s155 + $0x5f8] sm:$0xff]
        %v379 = vld [vmem:[%s155 + $0x600] sm:$0xff]
        %v380 = vld [vmem:[%s155 + $0x608] sm:$0xff]
        %v381 = vld [vmem:[%s155 + $0x610] sm:$0xff]
        %v382 = vld [vmem:[%s155 + $0x618] sm:$0xff]
        %v383 = vld [vmem:[%s155 + $0x620] sm:$0xff]
        %v384 = vld [vmem:[%s155 + $0x628] sm:$0xff]
        %v385 = vld [vmem:[%s155 + $0x630] sm:$0xff]
        %v386 = vld [vmem:[%s155 + $0x638] sm:$0xff]
        %v387 = vld [vmem:[%s155 + $0x640] sm:$0xff]
        %v388 = vld [vmem:[%s155 + $0x648] sm:$0xff]
        %v389 = vld [vmem:[%s155 + $0x650] sm:$0xff]
        %v390 = vld [vmem:[%s155 + $0x658] sm:$0xff]
        %v391 = vld [vmem:[%s155 + $0x660] sm:$0xff]
        %v392 = vld [vmem:[%s155 + $0x668] sm:$0xff]
        %v393 = vld [vmem:[%s155 + $0x670] sm:$0xff]
        %v394 = vld [vmem:[%s155 + $0x678] sm:$0xff]
        %v395 = vld [vmem:[%s155 + $0x680] sm:$0xff]
        %v396 = vld [vmem:[%s155 + $0x688] sm:$0xff]
        %v397 = vld [vmem:[%s155 + $0x690] sm:$0xff]
        %v398 = vld [vmem:[%s155 + $0x698] sm:$0xff]
        %v399 = vld [vmem:[%s155 + $0x6a0] sm:$0xff]
        %v400 = vld [vmem:[%s155 + $0x6a8] sm:$0xff]
        %v401 = vld [vmem:[%s155 + $0x6b0] sm:$0xff]
        %v402 = vld [vmem:[%s155 + $0x6b8] sm:$0xff]
        %v403 = vld [vmem:[%s155 + $0x6c0] sm:$0xff]
        %v404 = vld [vmem:[%s155 + $0x6c8] sm:$0xff]
        %v405 = vld [vmem:[%s155 + $0x6d0] sm:$0xff]
        %v406 = vld [vmem:[%s155 + $0x6d8] sm:$0xff]
        %v407 = vld [vmem:[%s155 + $0x6e0] sm:$0xff]
        %v408 = vld [vmem:[%s155 + $0x6e8] sm:$0xff]
        %v409 = vld [vmem:[%s155 + $0x6f0] sm:$0xff]
        %v410 = vld [vmem:[%s155 + $0x6f8] sm:$0xff]
        %v411 = vld [vmem:[%s155 + $0x700] sm:$0xff]
        %v412 = vld [vmem:[%s155 + $0x708] sm:$0xff]
        %v413 = vld [vmem:[%s155 + $0x710] sm:$0xff]
        %v414 = vld [vmem:[%s155 + $0x718] sm:$0xff]
        %v415 = vld [vmem:[%s155 + $0x720] sm:$0xff]
        %v416 = vld [vmem:[%s155 + $0x728] sm:$0xff]
        %v417 = vld [vmem:[%s155 + $0x730] sm:$0xff]
        %v418 = vld [vmem:[%s155 + $0x738] sm:$0xff]
        %v419 = vld [vmem:[%s155 + $0x740] sm:$0xff]
        %v420 = vld [vmem:[%s155 + $0x748] sm:$0xff]
        %v421 = vld [vmem:[%s155 + $0x750] sm:$0xff]
        %v422 = vld [vmem:[%s155 + $0x758] sm:$0xff]
        %v423 = vld [vmem:[%s155 + $0x760] sm:$0xff]
        %v424 = vld [vmem:[%s155 + $0x768] sm:$0xff]
        %v425 = vld [vmem:[%s155 + $0x770] sm:$0xff]
        %v426 = vld [vmem:[%s155 + $0x778] sm:$0xff]
        %v427 = vld [vmem:[%s155 + $0x780] sm:$0xff]
        %v428 = vld [vmem:[%s155 + $0x788] sm:$0xff]
        %v429 = vld [vmem:[%s155 + $0x790] sm:$0xff]
        %v430 = vld [vmem:[%s155 + $0x798] sm:$0xff]
        %v431 = vld [vmem:[%s155 + $0x7a0] sm:$0xff]
        %v432 = vld [vmem:[%s155 + $0x7a8] sm:$0xff]
        %v433 = vld [vmem:[%s155 + $0x7b0] sm:$0xff]
        %v434 = vld [vmem:[%s155 + $0x7b8] sm:$0xff]
        %v435 = vld [vmem:[%s155 + $0x7c0] sm:$0xff]
        %v436 = vld [vmem:[%s155 + $0x7c8] sm:$0xff]
        %v437 = vld [vmem:[%s155 + $0x7d0] sm:$0xff]
        %v438 = vld [vmem:[%s155 + $0x7d8] sm:$0xff]
        %v439 = vld [vmem:[%s155 + $0x7e0] sm:$0xff]
        %v440 = vld [vmem:[%s155 + $0x7e8] sm:$0xff]
        %v441 = vld [vmem:[%s155 + $0x7f0] sm:$0xff]
        %v442 = vld [vmem:[%s155 + $0x7f8] sm:$0xff]
        %v443 = vld [vmem:[%s155 + $0x800] sm:$0xff]
        %v444 = vld [vmem:[%s155 + $0x808] sm:$0xff]
        %v445 = vld [vmem:[%s155 + $0x810] sm:$0xff]
        %v446 = vld [vmem:[%s155 + $0x818] sm:$0xff]
        %v447 = vld [vmem:[%s155 + $0x820] sm:$0xff]
        %v448 = vld [vmem:[%s155 + $0x828] sm:$0xff]
        %v449 = vld [vmem:[%s155 + $0x830] sm:$0xff]
        %v450 = vld [vmem:[%s155 + $0x838] sm:$0xff]
        %v451 = vld [vmem:[%s155 + $0x840] sm:$0xff]
        %v452 = vld [vmem:[%s155 + $0x848] sm:$0xff]
        %v453 = vld [vmem:[%s155 + $0x850] sm:$0xff]
        %v454 = vld [vmem:[%s155 + $0x858] sm:$0xff]
        %v455 = vld [vmem:[%s155 + $0x860] sm:$0xff]
        %v456 = vld [vmem:[%s155 + $0x868] sm:$0xff]
        %v457 = vld [vmem:[%s155 + $0x870] sm:$0xff]
        %v458 = vld [vmem:[%s155 + $0x878] sm:$0xff]
        %v459 = vld [vmem:[%s155 + $0x880] sm:$0xff]
        %v460 = vld [vmem:[%s155 + $0x888] sm:$0xff]
        %v461 = vld [vmem:[%s155 + $0x890] sm:$0xff]
        %v462 = vld [vmem:[%s155 + $0x898] sm:$0xff]
        %v463 = vld [vmem:[%s155 + $0x8a0] sm:$0xff]
        %v464 = vld [vmem:[%s155 + $0x8a8] sm:$0xff]
        %v465 = vld [vmem:[%s155 + $0x8b0] sm:$0xff]
        %v466 = vld [vmem:[%s155 + $0x8b8] sm:$0xff]
        %v467 = vld [vmem:[%s155 + $0x8c0] sm:$0xff]
        %v468 = vld [vmem:[%s155 + $0x8c8] sm:$0xff]
        %v469 = vld [vmem:[%s155 + $0x8d0] sm:$0xff]
        %v470 = vld [vmem:[%s155 + $0x8d8] sm:$0xff]
        %v471 = vld [vmem:[%s155 + $0x8e0] sm:$0xff]
        %v472 = vld [vmem:[%s155 + $0x8e8] sm:$0xff]
        %v473 = vld [vmem:[%s155 + $0x8f0] sm:$0xff]
        %v474 = vld [vmem:[%s155 + $0x8f8] sm:$0xff]
        %v475 = vld [vmem:[%s155 + $0x900] sm:$0xff]
        %v476 = vld [vmem:[%s155 + $0x908] sm:$0xff]
        %v477 = vld [vmem:[%s155 + $0x910] sm:$0xff]
        %v478 = vld [vmem:[%s155 + $0x918] sm:$0xff]
        %v479 = vld [vmem:[%s155 + $0x920] sm:$0xff]
        %v480 = vld [vmem:[%s155 + $0x928] sm:$0xff]
        %v481 = vld [vmem:[%s155 + $0x930] sm:$0xff]
        %v482 = vld [vmem:[%s155 + $0x938] sm:$0xff]
        %v483 = vld [vmem:[%s155 + $0x940] sm:$0xff]
        %v484 = vld [vmem:[%s155 + $0x948] sm:$0xff]
        %v485 = vld [vmem:[%s155 + $0x950] sm:$0xff]
        %v486 = vld [vmem:[%s155 + $0x958] sm:$0xff]
        %v487 = vld [vmem:[%s155 + $0x960] sm:$0xff]
        %v488 = vld [vmem:[%s155 + $0x968] sm:$0xff]
        %v489 = vld [vmem:[%s155 + $0x970] sm:$0xff]
        %v490 = vld [vmem:[%s155 + $0x978] sm:$0xff]
        %v491 = vld [vmem:[%s155 + $0x980] sm:$0xff]
        %v492 = vld [vmem:[%s155 + $0x988] sm:$0xff]
        %v493 = vld [vmem:[%s155 + $0x990] sm:$0xff]
        %v494 = vld [vmem:[%s155 + $0x998] sm:$0xff]
        %v495 = vld [vmem:[%s155 + $0x9a0] sm:$0xff]
        %v496 = vld [vmem:[%s155 + $0x9a8] sm:$0xff]
        %v497 = vld [vmem:[%s155 + $0x9b0] sm:$0xff]
        %v498 = vld [vmem:[%s155 + $0x9b8] sm:$0xff]
        %v499 = vld [vmem:[%s155 + $0x9c0] sm:$0xff]
        %v500 = vld [vmem:[%s155 + $0x9c8] sm:$0xff]
        %v501 = vld [vmem:[%s155 + $0x9d0] sm:$0xff]
        %v502 = vld [vmem:[%s155 + $0x9d8] sm:$0xff]
        %v503 = vld [vmem:[%s155 + $0x9e0] sm:$0xff]
        %v504 = vld [vmem:[%s155 + $0x9e8] sm:$0xff]
        %v505 = vld [vmem:[%s155 + $0x9f0] sm:$0xff]
        %v506 = vld [vmem:[%s155 + $0x9f8] sm:$0xff]
        %v507 = vld [vmem:[%s155 + $0xa00] sm:$0xff]
        %v508 = vld [vmem:[%s155 + $0xa08] sm:$0xff]
        %v509 = vld [vmem:[%s155 + $0xa10] sm:$0xff]
        %v510 = vld [vmem:[%s155 + $0xa18] sm:$0xff]
        %v511 = vld [vmem:[%s155 + $0xa20] sm:$0xff]
        %v512 = vld [vmem:[%s155 + $0xa28] sm:$0xff]
        %v513 = vld [vmem:[%s155 + $0xa30] sm:$0xff]
        %v514 = vld [vmem:[%s155 + $0xa38] sm:$0xff]
        %v515 = vld [vmem:[%s155 + $0xa40] sm:$0xff]
        %v516 = vld [vmem:[%s155 + $0xa48] sm:$0xff]
        %v517 = vld [vmem:[%s155 + $0xa50] sm:$0xff]
        %v518 = vld [vmem:[%s155 + $0xa58] sm:$0xff]
        %v519 = vld [vmem:[%s155 + $0xa60] sm:$0xff]
        %v520 = vld [vmem:[%s155 + $0xa68] sm:$0xff]
        %v521 = vld [vmem:[%s155 + $0xa70] sm:$0xff]
        %v522 = vld [vmem:[%s155 + $0xa78] sm:$0xff]
        %v523 = vld [vmem:[%s155 + $0xa80] sm:$0xff]
        %v524 = vld [vmem:[%s155 + $0xa88] sm:$0xff]
        %v525 = vld [vmem:[%s155 + $0xa90] sm:$0xff]
        %v526 = vld [vmem:[%s155 + $0xa98] sm:$0xff]
        %v527 = vld [vmem:[%s155 + $0xaa0] sm:$0xff]
        %v528 = vld [vmem:[%s155 + $0xaa8] sm:$0xff]
        %v529 = vld [vmem:[%s155 + $0xab0] sm:$0xff]
        %v530 = vld [vmem:[%s155 + $0xab8] sm:$0xff]
        %v531 = vld [vmem:[%s155 + $0xac0] sm:$0xff]
        %v532 = vld [vmem:[%s155 + $0xac8] sm:$0xff]
        %v533 = vld [vmem:[%s155 + $0xad0] sm:$0xff]
        %v534 = vld [vmem:[%s155 + $0xad8] sm:$0xff]
        %v535 = vld [vmem:[%s155 + $0xae0] sm:$0xff]
        %v536 = vld [vmem:[%s155 + $0xae8] sm:$0xff]
        %v537 = vld [vmem:[%s155 + $0xaf0] sm:$0xff]
        %v538 = vld [vmem:[%s155 + $0xaf8] sm:$0xff]
        %v539 = vld [vmem:[%s155 + $0xb00] sm:$0xff]
        %v540 = vld [vmem:[%s155 + $0xb08] sm:$0xff]
        %v541 = vld [vmem:[%s155 + $0xb10] sm:$0xff]
        %v542 = vld [vmem:[%s155 + $0xb18] sm:$0xff]
        %v543 = vld [vmem:[%s155 + $0xb20] sm:$0xff]
        %v544 = vld [vmem:[%s155 + $0xb28] sm:$0xff]
        %v545 = vld [vmem:[%s155 + $0xb30] sm:$0xff]
        %v546 = vld [vmem:[%s155 + $0xb38] sm:$0xff]
        %v547 = vld [vmem:[%s155 + $0xb40] sm:$0xff]
        %v548 = vld [vmem:[%s155 + $0xb48] sm:$0xff]
        %v549 = vld [vmem:[%s155 + $0xb50] sm:$0xff]
        %v550 = vld [vmem:[%s155 + $0xb58] sm:$0xff]
        %v551 = vld [vmem:[%s155 + $0xb60] sm:$0xff]
        %v552 = vld [vmem:[%s155 + $0xb68] sm:$0xff]
        %v553 = vld [vmem:[%s155 + $0xb70] sm:$0xff]
        %v554 = vld [vmem:[%s155 + $0xb78] sm:$0xff]
        %v555 = vld [vmem:[%s155 + $0xb80] sm:$0xff]
        %v556 = vld [vmem:[%s155 + $0xb88] sm:$0xff]
        %v557 = vld [vmem:[%s155 + $0xb90] sm:$0xff]
        %v558 = vld [vmem:[%s155 + $0xb98] sm:$0xff]
        %v559 = vld [vmem:[%s155 + $0xba0] sm:$0xff]
        %v560 = vld [vmem:[%s155 + $0xba8] sm:$0xff]
        %v561 = vld [vmem:[%s155 + $0xbb0] sm:$0xff]
        %v562 = vld [vmem:[%s155 + $0xbb8] sm:$0xff]
        %v563 = vld [vmem:[%s155 + $0xbc0] sm:$0xff]
        %v564 = vld [vmem:[%s155 + $0xbc8] sm:$0xff]
        %v565 = vld [vmem:[%s155 + $0xbd0] sm:$0xff]
        %v566 = vld [vmem:[%s155 + $0xbd8] sm:$0xff]
        %v567 = vld [vmem:[%s155 + $0xbe0] sm:$0xff]
        %v568 = vld [vmem:[%s155 + $0xbe8] sm:$0xff]
        %v569 = vld [vmem:[%s155 + $0xbf0] sm:$0xff]
        %v570 = vld [vmem:[%s155 + $0xbf8] sm:$0xff]
        %v571 = vld [vmem:[%s155 + $0xc00] sm:$0xff]
        %v572 = vld [vmem:[%s155 + $0xc08] sm:$0xff]
        %v573 = vld [vmem:[%s155 + $0xc10] sm:$0xff]
        %v574 = vld [vmem:[%s155 + $0xc18] sm:$0xff]
        %v575 = vld [vmem:[%s155 + $0xc20] sm:$0xff]
        %v576 = vld [vmem:[%s155 + $0xc28] sm:$0xff]
        %v577 = vld [vmem:[%s155 + $0xc30] sm:$0xff]
        %v578 = vld [vmem:[%s155 + $0xc38] sm:$0xff]
        %v579 = vld [vmem:[%s155 + $0xc40] sm:$0xff]
        %v580 = vld [vmem:[%s155 + $0xc48] sm:$0xff]
        %v581 = vld [vmem:[%s155 + $0xc50] sm:$0xff]
        %v582 = vld [vmem:[%s155 + $0xc58] sm:$0xff]
        %v583 = vld [vmem:[%s155 + $0xc60] sm:$0xff]
        %v584 = vld [vmem:[%s155 + $0xc68] sm:$0xff]
        %v585 = vld [vmem:[%s155 + $0xc70] sm:$0xff]
        %v586 = vld [vmem:[%s155 + $0xc78] sm:$0xff]
        %v587 = vld [vmem:[%s155 + $0xc80] sm:$0xff]
        %v588 = vld [vmem:[%s155 + $0xc88] sm:$0xff]
        %v589 = vld [vmem:[%s155 + $0xc90] sm:$0xff]
        %v590 = vld [vmem:[%s155 + $0xc98] sm:$0xff]
        %v591 = vld [vmem:[%s155 + $0xca0] sm:$0xff]
        %v592 = vld [vmem:[%s155 + $0xca8] sm:$0xff]
        %v593 = vld [vmem:[%s155 + $0xcb0] sm:$0xff]
        %v594 = vld [vmem:[%s155 + $0xcb8] sm:$0xff]
        %v595 = vld [vmem:[%s155 + $0xcc0] sm:$0xff]
        %v596 = vld [vmem:[%s155 + $0xcc8] sm:$0xff]
        %v597 = vld [vmem:[%s155 + $0xcd0] sm:$0xff]
        %v598 = vld [vmem:[%s155 + $0xcd8] sm:$0xff]
        %v599 = vld [vmem:[%s155 + $0xce0] sm:$0xff]
        %v600 = vld [vmem:[%s155 + $0xce8] sm:$0xff]
        %v601 = vld [vmem:[%s155 + $0xcf0] sm:$0xff]
        %v602 = vld [vmem:[%s155 + $0xcf8] sm:$0xff]
        %v603 = vld [vmem:[%s155 + $0xd00] sm:$0xff]
        %v604 = vld [vmem:[%s155 + $0xd08] sm:$0xff]
        %v605 = vld [vmem:[%s155 + $0xd10] sm:$0xff]
        %v606 = vld [vmem:[%s155 + $0xd18] sm:$0xff]
        %v607 = vld [vmem:[%s155 + $0xd20] sm:$0xff]
        %v608 = vld [vmem:[%s155 + $0xd28] sm:$0xff]
        %v609 = vld [vmem:[%s155 + $0xd30] sm:$0xff]
        %v610 = vld [vmem:[%s155 + $0xd38] sm:$0xff]
        %v611 = vld [vmem:[%s155 + $0xd40] sm:$0xff]
        %v612 = vld [vmem:[%s155 + $0xd48] sm:$0xff]
        %v613 = vld [vmem:[%s155 + $0xd50] sm:$0xff]
        %v614 = vld [vmem:[%s155 + $0xd58] sm:$0xff]
        %v615 = vld [vmem:[%s155 + $0xd60] sm:$0xff]
        %v616 = vld [vmem:[%s155 + $0xd68] sm:$0xff]
        %v617 = vld [vmem:[%s155 + $0xd70] sm:$0xff]
        %v618 = vld [vmem:[%s155 + $0xd78] sm:$0xff]
        %v619 = vld [vmem:[%s155 + $0xd80] sm:$0xff]
        %v620 = vld [vmem:[%s155 + $0xd88] sm:$0xff]
        %v621 = vld [vmem:[%s155 + $0xd90] sm:$0xff]
        %v622 = vld [vmem:[%s155 + $0xd98] sm:$0xff]
        %v623 = vld [vmem:[%s155 + $0xda0] sm:$0xff]
        %v624 = vld [vmem:[%s155 + $0xda8] sm:$0xff]
        %v625 = vld [vmem:[%s155 + $0xdb0] sm:$0xff]
        %v626 = vld [vmem:[%s155 + $0xdb8] sm:$0xff]
        %v627 = vld [vmem:[%s155 + $0xdc0] sm:$0xff]
        %v628 = vld [vmem:[%s155 + $0xdc8] sm:$0xff]
        %v629 = vld [vmem:[%s155 + $0xdd0] sm:$0xff]
        %v630 = vld [vmem:[%s155 + $0xdd8] sm:$0xff]
        %v631 = vld [vmem:[%s155 + $0xde0] sm:$0xff]
        %v632 = vld [vmem:[%s155 + $0xde8] sm:$0xff]
        %v633 = vld [vmem:[%s155 + $0xdf0] sm:$0xff]
        %v634 = vld [vmem:[%s155 + $0xdf8] sm:$0xff]
        %v635 = vld [vmem:[%s155 + $0xe00] sm:$0xff]
        %v636 = vld [vmem:[%s155 + $0xe08] sm:$0xff]
        %v637 = vld [vmem:[%s155 + $0xe10] sm:$0xff]
        %v638 = vld [vmem:[%s155 + $0xe18] sm:$0xff]
        %v639 = vld [vmem:[%s155 + $0xe20] sm:$0xff]
        %v640 = vld [vmem:[%s155 + $0xe28] sm:$0xff]
        %v641 = vld [vmem:[%s155 + $0xe30] sm:$0xff]
        %v642 = vld [vmem:[%s155 + $0xe38] sm:$0xff]
        %v643 = vld [vmem:[%s155 + $0xe40] sm:$0xff]
        %v644 = vld [vmem:[%s155 + $0xe48] sm:$0xff]
        %v645 = vld [vmem:[%s155 + $0xe50] sm:$0xff]
        %v646 = vld [vmem:[%s155 + $0xe58] sm:$0xff]
        %v647 = vld [vmem:[%s155 + $0xe60] sm:$0xff]
        %v648 = vld [vmem:[%s155 + $0xe68] sm:$0xff]
        %v649 = vld [vmem:[%s155 + $0xe70] sm:$0xff]
        %v650 = vld [vmem:[%s155 + $0xe78] sm:$0xff]
        %v651 = vld [vmem:[%s155 + $0xe80] sm:$0xff]
        %v652 = vld [vmem:[%s155 + $0xe88] sm:$0xff]
        %v653 = vld [vmem:[%s155 + $0xe90] sm:$0xff]
        %v654 = vld [vmem:[%s155 + $0xe98] sm:$0xff]
        %v655 = vld [vmem:[%s155 + $0xea0] sm:$0xff]
        %v656 = vld [vmem:[%s155 + $0xea8] sm:$0xff]
        %v657 = vld [vmem:[%s155 + $0xeb0] sm:$0xff]
        %v658 = vld [vmem:[%s155 + $0xeb8] sm:$0xff]
        %v659 = vld [vmem:[%s155 + $0xec0] sm:$0xff]
        %v660 = vld [vmem:[%s155 + $0xec8] sm:$0xff]
        %v661 = vld [vmem:[%s155 + $0xed0] sm:$0xff]
        %v662 = vld [vmem:[%s155 + $0xed8] sm:$0xff]
        %v663 = vld [vmem:[%s155 + $0xee0] sm:$0xff]
        %v664 = vld [vmem:[%s155 + $0xee8] sm:$0xff]
        %v665 = vld [vmem:[%s155 + $0xef0] sm:$0xff]
        %v666 = vld [vmem:[%s155 + $0xef8] sm:$0xff]
        %667 = vxpose.xlu0.b32.start [1/16] %v187, 128
        %668 = vxpose.xlu0.b32.cont [2/16] %v192, 128
        %669 = vxpose.xlu0.b32.cont [3/16] %v197, 128
        %670 = vxpose.xlu0.b32.cont [4/16] %v202, 128
        %671 = vxpose.xlu0.b32.cont [5/16] %v207, 128
        %672 = vxpose.xlu0.b32.cont [6/16] %v212, 128
        %673 = vxpose.xlu0.b32.cont [7/16] %v217, 128
        %674 = vxpose.xlu0.b32.cont [8/16] %v222, 128
        %675 = vxpose.xlu0.b32.cont [9/16] %v227, 128
        %676 = vxpose.xlu0.b32.cont [10/16] %v232, 128
        %677 = vxpose.xlu0.b32.cont [11/16] %v237, 128
        %678 = vxpose.xlu0.b32.cont [12/16] %v242, 128
        %679 = vxpose.xlu0.b32.cont [13/16] %v247, 128
        %680 = vxpose.xlu0.b32.cont [14/16] %v252, 128
        %681 = vxpose.xlu0.b32.cont [15/16] %v257, 128
        %682 = vxpose.xlu0.b32.end [16/16] %v262, 128
        %v683 = vpop.trf.xlu0
        %v684 = vpop.trf.xlu0
        %v685 = vpop.trf.xlu0
        %v686 = vpop.trf.xlu0
        %v687 = vpop.trf.xlu0
        %v688 = vpop.trf.xlu0
        %v689 = vpop.trf.xlu0
        %v690 = vpop.trf.xlu0
        %v691 = vpop.trf.xlu0
        %v692 = vpop.trf.xlu0
        %v693 = vpop.trf.xlu0
        %v694 = vpop.trf.xlu0
        %v695 = vpop.trf.xlu0
        %v696 = vpop.trf.xlu0
        %v697 = vpop.trf.xlu0
        %v698 = vpop.trf.xlu0
        %699 = vxpose.xlu0.b32.start [1/16] %v188, 128
        %700 = vxpose.xlu0.b32.cont [2/16] %v193, 128
        %701 = vxpose.xlu0.b32.cont [3/16] %v198, 128
        %702 = vxpose.xlu0.b32.cont [4/16] %v203, 128
        %703 = vxpose.xlu0.b32.cont [5/16] %v208, 128
        %704 = vxpose.xlu0.b32.cont [6/16] %v213, 128
        %705 = vxpose.xlu0.b32.cont [7/16] %v218, 128
        %706 = vxpose.xlu0.b32.cont [8/16] %v223, 128
        %707 = vxpose.xlu0.b32.cont [9/16] %v228, 128
        %708 = vxpose.xlu0.b32.cont [10/16] %v233, 128
        %709 = vxpose.xlu0.b32.cont [11/16] %v238, 128
        %710 = vxpose.xlu0.b32.cont [12/16] %v243, 128
        %711 = vxpose.xlu0.b32.cont [13/16] %v248, 128
        %712 = vxpose.xlu0.b32.cont [14/16] %v253, 128
        %713 = vxpose.xlu0.b32.cont [15/16] %v258, 128
        %714 = vxpose.xlu0.b32.end [16/16] %v263, 128
        %v715 = vpop.trf.xlu0
        %v716 = vpop.trf.xlu0
        %v717 = vpop.trf.xlu0
        %v718 = vpop.trf.xlu0
        %v719 = vpop.trf.xlu0
        %v720 = vpop.trf.xlu0
        %v721 = vpop.trf.xlu0
        %v722 = vpop.trf.xlu0
        %v723 = vpop.trf.xlu0
        %v724 = vpop.trf.xlu0
        %v725 = vpop.trf.xlu0
        %v726 = vpop.trf.xlu0
        %v727 = vpop.trf.xlu0
        %v728 = vpop.trf.xlu0
        %v729 = vpop.trf.xlu0
        %v730 = vpop.trf.xlu0
        %731 = vxpose.xlu0.b32.start [1/16] %v189, 128
        %732 = vxpose.xlu0.b32.cont [2/16] %v194, 128
        %733 = vxpose.xlu0.b32.cont [3/16] %v199, 128
        %734 = vxpose.xlu0.b32.cont [4/16] %v204, 128
        %735 = vxpose.xlu0.b32.cont [5/16] %v209, 128
        %736 = vxpose.xlu0.b32.cont [6/16] %v214, 128
        %737 = vxpose.xlu0.b32.cont [7/16] %v219, 128
        %738 = vxpose.xlu0.b32.cont [8/16] %v224, 128
        %739 = vxpose.xlu0.b32.cont [9/16] %v229, 128
        %740 = vxpose.xlu0.b32.cont [10/16] %v234, 128
        %741 = vxpose.xlu0.b32.cont [11/16] %v239, 128
        %742 = vxpose.xlu0.b32.cont [12/16] %v244, 128
        %743 = vxpose.xlu0.b32.cont [13/16] %v249, 128
        %744 = vxpose.xlu0.b32.cont [14/16] %v254, 128
        %745 = vxpose.xlu0.b32.cont [15/16] %v259, 128
        %746 = vxpose.xlu0.b32.end [16/16] %v264, 128
        %v747 = vpop.trf.xlu0
        %v748 = vpop.trf.xlu0
        %v749 = vpop.trf.xlu0
        %v750 = vpop.trf.xlu0
        %v751 = vpop.trf.xlu0
        %v752 = vpop.trf.xlu0
        %v753 = vpop.trf.xlu0
        %v754 = vpop.trf.xlu0
        %v755 = vpop.trf.xlu0
        %v756 = vpop.trf.xlu0
        %v757 = vpop.trf.xlu0
        %v758 = vpop.trf.xlu0
        %v759 = vpop.trf.xlu0
        %v760 = vpop.trf.xlu0
        %v761 = vpop.trf.xlu0
        %v762 = vpop.trf.xlu0
        %763 = vxpose.xlu0.b32.start [1/16] %v190, 128
        %764 = vxpose.xlu0.b32.cont [2/16] %v195, 128
        %765 = vxpose.xlu0.b32.cont [3/16] %v200, 128
        %766 = vxpose.xlu0.b32.cont [4/16] %v205, 128
        %767 = vxpose.xlu0.b32.cont [5/16] %v210, 128
        %768 = vxpose.xlu0.b32.cont [6/16] %v215, 128
        %769 = vxpose.xlu0.b32.cont [7/16] %v220, 128
        %770 = vxpose.xlu0.b32.cont [8/16] %v225, 128
        %771 = vxpose.xlu0.b32.cont [9/16] %v230, 128
        %772 = vxpose.xlu0.b32.cont [10/16] %v235, 128
        %773 = vxpose.xlu0.b32.cont [11/16] %v240, 128
        %774 = vxpose.xlu0.b32.cont [12/16] %v245, 128
        %775 = vxpose.xlu0.b32.cont [13/16] %v250, 128
        %776 = vxpose.xlu0.b32.cont [14/16] %v255, 128
        %777 = vxpose.xlu0.b32.cont [15/16] %v260, 128
        %778 = vxpose.xlu0.b32.end [16/16] %v265, 128
        %v779 = vpop.trf.xlu0
        %v780 = vpop.trf.xlu0
        %v781 = vpop.trf.xlu0
        %v782 = vpop.trf.xlu0
        %v783 = vpop.trf.xlu0
        %v784 = vpop.trf.xlu0
        %v785 = vpop.trf.xlu0
        %v786 = vpop.trf.xlu0
        %v787 = vpop.trf.xlu0
        %v788 = vpop.trf.xlu0
        %v789 = vpop.trf.xlu0
        %v790 = vpop.trf.xlu0
        %v791 = vpop.trf.xlu0
        %v792 = vpop.trf.xlu0
        %v793 = vpop.trf.xlu0
        %v794 = vpop.trf.xlu0
        %795 = vxpose.xlu0.b32.start [1/16] %v191, 128
        %796 = vxpose.xlu0.b32.cont [2/16] %v196, 128
        %797 = vxpose.xlu0.b32.cont [3/16] %v201, 128
        %798 = vxpose.xlu0.b32.cont [4/16] %v206, 128
        %799 = vxpose.xlu0.b32.cont [5/16] %v211, 128
        %800 = vxpose.xlu0.b32.cont [6/16] %v216, 128
        %801 = vxpose.xlu0.b32.cont [7/16] %v221, 128
        %802 = vxpose.xlu0.b32.cont [8/16] %v226, 128
        %803 = vxpose.xlu0.b32.cont [9/16] %v231, 128
        %804 = vxpose.xlu0.b32.cont [10/16] %v236, 128
        %805 = vxpose.xlu0.b32.cont [11/16] %v241, 128
        %806 = vxpose.xlu0.b32.cont [12/16] %v246, 128
        %807 = vxpose.xlu0.b32.cont [13/16] %v251, 128
        %808 = vxpose.xlu0.b32.cont [14/16] %v256, 128
        %809 = vxpose.xlu0.b32.cont [15/16] %v261, 128
        %810 = vxpose.xlu0.b32.end [16/16] %v266, 128
        %v811 = vpop.trf.xlu0
        %v812 = vpop.trf.xlu0
        %v813 = vpop.trf.xlu0
        %v814 = vpop.trf.xlu0
        %v815 = vpop.trf.xlu0
        %v816 = vpop.trf.xlu0
        %v817 = vpop.trf.xlu0
        %v818 = vpop.trf.xlu0
        %v819 = vpop.trf.xlu0
        %v820 = vpop.trf.xlu0
        %v821 = vpop.trf.xlu0
        %v822 = vpop.trf.xlu0
        %v823 = vpop.trf.xlu0
        %v824 = vpop.trf.xlu0
        %v825 = vpop.trf.xlu0
        %v826 = vpop.trf.xlu0
        %827 = vxpose.xlu0.b32.start [1/16] %v267, 128
        %828 = vxpose.xlu0.b32.cont [2/16] %v272, 128
        %829 = vxpose.xlu0.b32.cont [3/16] %v277, 128
        %830 = vxpose.xlu0.b32.cont [4/16] %v282, 128
        %831 = vxpose.xlu0.b32.cont [5/16] %v287, 128
        %832 = vxpose.xlu0.b32.cont [6/16] %v292, 128
        %833 = vxpose.xlu0.b32.cont [7/16] %v297, 128
        %834 = vxpose.xlu0.b32.cont [8/16] %v302, 128
        %835 = vxpose.xlu0.b32.cont [9/16] %v307, 128
        %836 = vxpose.xlu0.b32.cont [10/16] %v312, 128
        %837 = vxpose.xlu0.b32.cont [11/16] %v317, 128
        %838 = vxpose.xlu0.b32.cont [12/16] %v322, 128
        %839 = vxpose.xlu0.b32.cont [13/16] %v327, 128
        %840 = vxpose.xlu0.b32.cont [14/16] %v332, 128
        %841 = vxpose.xlu0.b32.cont [15/16] %v337, 128
        %842 = vxpose.xlu0.b32.end [16/16] %v342, 128
        %v843 = vpop.trf.xlu0
        %v844 = vpop.trf.xlu0
        %v845 = vpop.trf.xlu0
        %v846 = vpop.trf.xlu0
        %v847 = vpop.trf.xlu0
        %v848 = vpop.trf.xlu0
        %v849 = vpop.trf.xlu0
        %v850 = vpop.trf.xlu0
        %v851 = vpop.trf.xlu0
        %v852 = vpop.trf.xlu0
        %v853 = vpop.trf.xlu0
        %v854 = vpop.trf.xlu0
        %v855 = vpop.trf.xlu0
        %v856 = vpop.trf.xlu0
        %v857 = vpop.trf.xlu0
        %v858 = vpop.trf.xlu0
        %859 = vxpose.xlu0.b32.start [1/16] %v268, 128
        %860 = vxpose.xlu0.b32.cont [2/16] %v273, 128
        %861 = vxpose.xlu0.b32.cont [3/16] %v278, 128
        %862 = vxpose.xlu0.b32.cont [4/16] %v283, 128
        %863 = vxpose.xlu0.b32.cont [5/16] %v288, 128
        %864 = vxpose.xlu0.b32.cont [6/16] %v293, 128
        %865 = vxpose.xlu0.b32.cont [7/16] %v298, 128
        %866 = vxpose.xlu0.b32.cont [8/16] %v303, 128
        %867 = vxpose.xlu0.b32.cont [9/16] %v308, 128
        %868 = vxpose.xlu0.b32.cont [10/16] %v313, 128
        %869 = vxpose.xlu0.b32.cont [11/16] %v318, 128
        %870 = vxpose.xlu0.b32.cont [12/16] %v323, 128
        %871 = vxpose.xlu0.b32.cont [13/16] %v328, 128
        %872 = vxpose.xlu0.b32.cont [14/16] %v333, 128
        %873 = vxpose.xlu0.b32.cont [15/16] %v338, 128
        %874 = vxpose.xlu0.b32.end [16/16] %v343, 128
        %v875 = vpop.trf.xlu0
        %v876 = vpop.trf.xlu0
        %v877 = vpop.trf.xlu0
        %v878 = vpop.trf.xlu0
        %v879 = vpop.trf.xlu0
        %v880 = vpop.trf.xlu0
        %v881 = vpop.trf.xlu0
        %v882 = vpop.trf.xlu0
        %v883 = vpop.trf.xlu0
        %v884 = vpop.trf.xlu0
        %v885 = vpop.trf.xlu0
        %v886 = vpop.trf.xlu0
        %v887 = vpop.trf.xlu0
        %v888 = vpop.trf.xlu0
        %v889 = vpop.trf.xlu0
        %v890 = vpop.trf.xlu0
        %891 = vxpose.xlu0.b32.start [1/16] %v269, 128
        %892 = vxpose.xlu0.b32.cont [2/16] %v274, 128
        %893 = vxpose.xlu0.b32.cont [3/16] %v279, 128
        %894 = vxpose.xlu0.b32.cont [4/16] %v284, 128
        %895 = vxpose.xlu0.b32.cont [5/16] %v289, 128
        %896 = vxpose.xlu0.b32.cont [6/16] %v294, 128
        %897 = vxpose.xlu0.b32.cont [7/16] %v299, 128
        %898 = vxpose.xlu0.b32.cont [8/16] %v304, 128
        %899 = vxpose.xlu0.b32.cont [9/16] %v309, 128
        %900 = vxpose.xlu0.b32.cont [10/16] %v314, 128
        %901 = vxpose.xlu0.b32.cont [11/16] %v319, 128
        %902 = vxpose.xlu0.b32.cont [12/16] %v324, 128
        %903 = vxpose.xlu0.b32.cont [13/16] %v329, 128
        %904 = vxpose.xlu0.b32.cont [14/16] %v334, 128
        %905 = vxpose.xlu0.b32.cont [15/16] %v339, 128
        %906 = vxpose.xlu0.b32.end [16/16] %v344, 128
        %v907 = vpop.trf.xlu0
        %v908 = vpop.trf.xlu0
        %v909 = vpop.trf.xlu0
        %v910 = vpop.trf.xlu0
        %v911 = vpop.trf.xlu0
        %v912 = vpop.trf.xlu0
        %v913 = vpop.trf.xlu0
        %v914 = vpop.trf.xlu0
        %v915 = vpop.trf.xlu0
        %v916 = vpop.trf.xlu0
        %v917 = vpop.trf.xlu0
        %v918 = vpop.trf.xlu0
        %v919 = vpop.trf.xlu0
        %v920 = vpop.trf.xlu0
        %v921 = vpop.trf.xlu0
        %v922 = vpop.trf.xlu0
        %923 = vxpose.xlu0.b32.start [1/16] %v270, 128
        %924 = vxpose.xlu0.b32.cont [2/16] %v275, 128
        %925 = vxpose.xlu0.b32.cont [3/16] %v280, 128
        %926 = vxpose.xlu0.b32.cont [4/16] %v285, 128
        %927 = vxpose.xlu0.b32.cont [5/16] %v290, 128
        %928 = vxpose.xlu0.b32.cont [6/16] %v295, 128
        %929 = vxpose.xlu0.b32.cont [7/16] %v300, 128
        %930 = vxpose.xlu0.b32.cont [8/16] %v305, 128
        %931 = vxpose.xlu0.b32.cont [9/16] %v310, 128
        %932 = vxpose.xlu0.b32.cont [10/16] %v315, 128
        %933 = vxpose.xlu0.b32.cont [11/16] %v320, 128
        %934 = vxpose.xlu0.b32.cont [12/16] %v325, 128
        %935 = vxpose.xlu0.b32.cont [13/16] %v330, 128
        %936 = vxpose.xlu0.b32.cont [14/16] %v335, 128
        %937 = vxpose.xlu0.b32.cont [15/16] %v340, 128
        %938 = vxpose.xlu0.b32.end [16/16] %v345, 128
        %v939 = vpop.trf.xlu0
        %v940 = vpop.trf.xlu0
        %v941 = vpop.trf.xlu0
        %v942 = vpop.trf.xlu0
        %v943 = vpop.trf.xlu0
        %v944 = vpop.trf.xlu0
        %v945 = vpop.trf.xlu0
        %v946 = vpop.trf.xlu0
        %v947 = vpop.trf.xlu0
        %v948 = vpop.trf.xlu0
        %v949 = vpop.trf.xlu0
        %v950 = vpop.trf.xlu0
        %v951 = vpop.trf.xlu0
        %v952 = vpop.trf.xlu0
        %v953 = vpop.trf.xlu0
        %v954 = vpop.trf.xlu0
        %955 = vxpose.xlu0.b32.start [1/16] %v271, 128
        %956 = vxpose.xlu0.b32.cont [2/16] %v276, 128
        %957 = vxpose.xlu0.b32.cont [3/16] %v281, 128
        %958 = vxpose.xlu0.b32.cont [4/16] %v286, 128
        %959 = vxpose.xlu0.b32.cont [5/16] %v291, 128
        %960 = vxpose.xlu0.b32.cont [6/16] %v296, 128
        %961 = vxpose.xlu0.b32.cont [7/16] %v301, 128
        %962 = vxpose.xlu0.b32.cont [8/16] %v306, 128
        %963 = vxpose.xlu0.b32.cont [9/16] %v311, 128
        %964 = vxpose.xlu0.b32.cont [10/16] %v316, 128
        %965 = vxpose.xlu0.b32.cont [11/16] %v321, 128
        %966 = vxpose.xlu0.b32.cont [12/16] %v326, 128
        %967 = vxpose.xlu0.b32.cont [13/16] %v331, 128
        %968 = vxpose.xlu0.b32.cont [14/16] %v336, 128
        %969 = vxpose.xlu0.b32.cont [15/16] %v341, 128
        %970 = vxpose.xlu0.b32.end [16/16] %v346, 128
        %v971 = vpop.trf.xlu0
        %v972 = vpop.trf.xlu0
        %v973 = vpop.trf.xlu0
        %v974 = vpop.trf.xlu0
        %v975 = vpop.trf.xlu0
        %v976 = vpop.trf.xlu0
        %v977 = vpop.trf.xlu0
        %v978 = vpop.trf.xlu0
        %v979 = vpop.trf.xlu0
        %v980 = vpop.trf.xlu0
        %v981 = vpop.trf.xlu0
        %v982 = vpop.trf.xlu0
        %v983 = vpop.trf.xlu0
        %v984 = vpop.trf.xlu0
        %v985 = vpop.trf.xlu0
        %v986 = vpop.trf.xlu0
        %987 = vxpose.xlu0.b32.start [1/16] %v347, 128
        %988 = vxpose.xlu0.b32.cont [2/16] %v352, 128
        %989 = vxpose.xlu0.b32.cont [3/16] %v357, 128
        %990 = vxpose.xlu0.b32.cont [4/16] %v362, 128
        %991 = vxpose.xlu0.b32.cont [5/16] %v367, 128
        %992 = vxpose.xlu0.b32.cont [6/16] %v372, 128
        %993 = vxpose.xlu0.b32.cont [7/16] %v377, 128
        %994 = vxpose.xlu0.b32.cont [8/16] %v382, 128
        %995 = vxpose.xlu0.b32.cont [9/16] %v387, 128
        %996 = vxpose.xlu0.b32.cont [10/16] %v392, 128
        %997 = vxpose.xlu0.b32.cont [11/16] %v397, 128
        %998 = vxpose.xlu0.b32.cont [12/16] %v402, 128
        %999 = vxpose.xlu0.b32.cont [13/16] %v407, 128
        %1000 = vxpose.xlu0.b32.cont [14/16] %v412, 128
        %1001 = vxpose.xlu0.b32.cont [15/16] %v417, 128
        %1002 = vxpose.xlu0.b32.end [16/16] %v422, 128
        %v1003 = vpop.trf.xlu0
        %v1004 = vpop.trf.xlu0
        %v1005 = vpop.trf.xlu0
        %v1006 = vpop.trf.xlu0
        %v1007 = vpop.trf.xlu0
        %v1008 = vpop.trf.xlu0
        %v1009 = vpop.trf.xlu0
        %v1010 = vpop.trf.xlu0
        %v1011 = vpop.trf.xlu0
        %v1012 = vpop.trf.xlu0
        %v1013 = vpop.trf.xlu0
        %v1014 = vpop.trf.xlu0
        %v1015 = vpop.trf.xlu0
        %v1016 = vpop.trf.xlu0
        %v1017 = vpop.trf.xlu0
        %v1018 = vpop.trf.xlu0
        %1019 = vxpose.xlu0.b32.start [1/16] %v348, 128
        %1020 = vxpose.xlu0.b32.cont [2/16] %v353, 128
        %1021 = vxpose.xlu0.b32.cont [3/16] %v358, 128
        %1022 = vxpose.xlu0.b32.cont [4/16] %v363, 128
        %1023 = vxpose.xlu0.b32.cont [5/16] %v368, 128
        %1024 = vxpose.xlu0.b32.cont [6/16] %v373, 128
        %1025 = vxpose.xlu0.b32.cont [7/16] %v378, 128
        %1026 = vxpose.xlu0.b32.cont [8/16] %v383, 128
        %1027 = vxpose.xlu0.b32.cont [9/16] %v388, 128
        %1028 = vxpose.xlu0.b32.cont [10/16] %v393, 128
        %1029 = vxpose.xlu0.b32.cont [11/16] %v398, 128
        %1030 = vxpose.xlu0.b32.cont [12/16] %v403, 128
        %1031 = vxpose.xlu0.b32.cont [13/16] %v408, 128
        %1032 = vxpose.xlu0.b32.cont [14/16] %v413, 128
        %1033 = vxpose.xlu0.b32.cont [15/16] %v418, 128
        %1034 = vxpose.xlu0.b32.end [16/16] %v423, 128
        %v1035 = vpop.trf.xlu0
        %v1036 = vpop.trf.xlu0
        %v1037 = vpop.trf.xlu0
        %v1038 = vpop.trf.xlu0
        %v1039 = vpop.trf.xlu0
        %v1040 = vpop.trf.xlu0
        %v1041 = vpop.trf.xlu0
        %v1042 = vpop.trf.xlu0
        %v1043 = vpop.trf.xlu0
        %v1044 = vpop.trf.xlu0
        %v1045 = vpop.trf.xlu0
        %v1046 = vpop.trf.xlu0
        %v1047 = vpop.trf.xlu0
        %v1048 = vpop.trf.xlu0
        %v1049 = vpop.trf.xlu0
        %v1050 = vpop.trf.xlu0
        %1051 = vxpose.xlu0.b32.start [1/16] %v349, 128
        %1052 = vxpose.xlu0.b32.cont [2/16] %v354, 128
        %1053 = vxpose.xlu0.b32.cont [3/16] %v359, 128
        %1054 = vxpose.xlu0.b32.cont [4/16] %v364, 128
        %1055 = vxpose.xlu0.b32.cont [5/16] %v369, 128
        %1056 = vxpose.xlu0.b32.cont [6/16] %v374, 128
        %1057 = vxpose.xlu0.b32.cont [7/16] %v379, 128
        %1058 = vxpose.xlu0.b32.cont [8/16] %v384, 128
        %1059 = vxpose.xlu0.b32.cont [9/16] %v389, 128
        %1060 = vxpose.xlu0.b32.cont [10/16] %v394, 128
        %1061 = vxpose.xlu0.b32.cont [11/16] %v399, 128
        %1062 = vxpose.xlu0.b32.cont [12/16] %v404, 128
        %1063 = vxpose.xlu0.b32.cont [13/16] %v409, 128
        %1064 = vxpose.xlu0.b32.cont [14/16] %v414, 128
        %1065 = vxpose.xlu0.b32.cont [15/16] %v419, 128
        %1066 = vxpose.xlu0.b32.end [16/16] %v424, 128
        %v1067 = vpop.trf.xlu0
        %v1068 = vpop.trf.xlu0
        %v1069 = vpop.trf.xlu0
        %v1070 = vpop.trf.xlu0
        %v1071 = vpop.trf.xlu0
        %v1072 = vpop.trf.xlu0
        %v1073 = vpop.trf.xlu0
        %v1074 = vpop.trf.xlu0
        %v1075 = vpop.trf.xlu0
        %v1076 = vpop.trf.xlu0
        %v1077 = vpop.trf.xlu0
        %v1078 = vpop.trf.xlu0
        %v1079 = vpop.trf.xlu0
        %v1080 = vpop.trf.xlu0
        %v1081 = vpop.trf.xlu0
        %v1082 = vpop.trf.xlu0
        %1083 = vxpose.xlu0.b32.start [1/16] %v350, 128
        %1084 = vxpose.xlu0.b32.cont [2/16] %v355, 128
        %1085 = vxpose.xlu0.b32.cont [3/16] %v360, 128
        %1086 = vxpose.xlu0.b32.cont [4/16] %v365, 128
        %1087 = vxpose.xlu0.b32.cont [5/16] %v370, 128
        %1088 = vxpose.xlu0.b32.cont [6/16] %v375, 128
        %1089 = vxpose.xlu0.b32.cont [7/16] %v380, 128
        %1090 = vxpose.xlu0.b32.cont [8/16] %v385, 128
        %1091 = vxpose.xlu0.b32.cont [9/16] %v390, 128
        %1092 = vxpose.xlu0.b32.cont [10/16] %v395, 128
        %1093 = vxpose.xlu0.b32.cont [11/16] %v400, 128
        %1094 = vxpose.xlu0.b32.cont [12/16] %v405, 128
        %1095 = vxpose.xlu0.b32.cont [13/16] %v410, 128
        %1096 = vxpose.xlu0.b32.cont [14/16] %v415, 128
        %1097 = vxpose.xlu0.b32.cont [15/16] %v420, 128
        %1098 = vxpose.xlu0.b32.end [16/16] %v425, 128
        %v1099 = vpop.trf.xlu0
        %v1100 = vpop.trf.xlu0
        %v1101 = vpop.trf.xlu0
        %v1102 = vpop.trf.xlu0
        %v1103 = vpop.trf.xlu0
        %v1104 = vpop.trf.xlu0
        %v1105 = vpop.trf.xlu0
        %v1106 = vpop.trf.xlu0
        %v1107 = vpop.trf.xlu0
        %v1108 = vpop.trf.xlu0
        %v1109 = vpop.trf.xlu0
        %v1110 = vpop.trf.xlu0
        %v1111 = vpop.trf.xlu0
        %v1112 = vpop.trf.xlu0
        %v1113 = vpop.trf.xlu0
        %v1114 = vpop.trf.xlu0
        %1115 = vxpose.xlu0.b32.start [1/16] %v351, 128
        %1116 = vxpose.xlu0.b32.cont [2/16] %v356, 128
        %1117 = vxpose.xlu0.b32.cont [3/16] %v361, 128
        %1118 = vxpose.xlu0.b32.cont [4/16] %v366, 128
        %1119 = vxpose.xlu0.b32.cont [5/16] %v371, 128
        %1120 = vxpose.xlu0.b32.cont [6/16] %v376, 128
        %1121 = vxpose.xlu0.b32.cont [7/16] %v381, 128
        %1122 = vxpose.xlu0.b32.cont [8/16] %v386, 128
        %1123 = vxpose.xlu0.b32.cont [9/16] %v391, 128
        %1124 = vxpose.xlu0.b32.cont [10/16] %v396, 128
        %1125 = vxpose.xlu0.b32.cont [11/16] %v401, 128
        %1126 = vxpose.xlu0.b32.cont [12/16] %v406, 128
        %1127 = vxpose.xlu0.b32.cont [13/16] %v411, 128
        %1128 = vxpose.xlu0.b32.cont [14/16] %v416, 128
        %1129 = vxpose.xlu0.b32.cont [15/16] %v421, 128
        %1130 = vxpose.xlu0.b32.end [16/16] %v426, 128
        %v1131 = vpop.trf.xlu0
        %v1132 = vpop.trf.xlu0
        %v1133 = vpop.trf.xlu0
        %v1134 = vpop.trf.xlu0
        %v1135 = vpop.trf.xlu0
        %v1136 = vpop.trf.xlu0
        %v1137 = vpop.trf.xlu0
        %v1138 = vpop.trf.xlu0
        %v1139 = vpop.trf.xlu0
        %v1140 = vpop.trf.xlu0
        %v1141 = vpop.trf.xlu0
        %v1142 = vpop.trf.xlu0
        %v1143 = vpop.trf.xlu0
        %v1144 = vpop.trf.xlu0
        %v1145 = vpop.trf.xlu0
        %v1146 = vpop.trf.xlu0
        %1147 = vxpose.xlu0.b32.start [1/16] %v427, 128
        %1148 = vxpose.xlu0.b32.cont [2/16] %v432, 128
        %1149 = vxpose.xlu0.b32.cont [3/16] %v437, 128
        %1150 = vxpose.xlu0.b32.cont [4/16] %v442, 128
        %1151 = vxpose.xlu0.b32.cont [5/16] %v447, 128
        %1152 = vxpose.xlu0.b32.cont [6/16] %v452, 128
        %1153 = vxpose.xlu0.b32.cont [7/16] %v457, 128
        %1154 = vxpose.xlu0.b32.cont [8/16] %v462, 128
        %1155 = vxpose.xlu0.b32.cont [9/16] %v467, 128
        %1156 = vxpose.xlu0.b32.cont [10/16] %v472, 128
        %1157 = vxpose.xlu0.b32.cont [11/16] %v477, 128
        %1158 = vxpose.xlu0.b32.cont [12/16] %v482, 128
        %1159 = vxpose.xlu0.b32.cont [13/16] %v487, 128
        %1160 = vxpose.xlu0.b32.cont [14/16] %v492, 128
        %1161 = vxpose.xlu0.b32.cont [15/16] %v497, 128
        %1162 = vxpose.xlu0.b32.end [16/16] %v502, 128
        %v1163 = vpop.trf.xlu0
        %v1164 = vpop.trf.xlu0
        %v1165 = vpop.trf.xlu0
        %v1166 = vpop.trf.xlu0
        %v1167 = vpop.trf.xlu0
        %v1168 = vpop.trf.xlu0
        %v1169 = vpop.trf.xlu0
        %v1170 = vpop.trf.xlu0
        %v1171 = vpop.trf.xlu0
        %v1172 = vpop.trf.xlu0
        %v1173 = vpop.trf.xlu0
        %v1174 = vpop.trf.xlu0
        %v1175 = vpop.trf.xlu0
        %v1176 = vpop.trf.xlu0
        %v1177 = vpop.trf.xlu0
        %v1178 = vpop.trf.xlu0
        %1179 = vxpose.xlu0.b32.start [1/16] %v428, 128
        %1180 = vxpose.xlu0.b32.cont [2/16] %v433, 128
        %1181 = vxpose.xlu0.b32.cont [3/16] %v438, 128
        %1182 = vxpose.xlu0.b32.cont [4/16] %v443, 128
        %1183 = vxpose.xlu0.b32.cont [5/16] %v448, 128
        %1184 = vxpose.xlu0.b32.cont [6/16] %v453, 128
        %1185 = vxpose.xlu0.b32.cont [7/16] %v458, 128
        %1186 = vxpose.xlu0.b32.cont [8/16] %v463, 128
        %1187 = vxpose.xlu0.b32.cont [9/16] %v468, 128
        %1188 = vxpose.xlu0.b32.cont [10/16] %v473, 128
        %1189 = vxpose.xlu0.b32.cont [11/16] %v478, 128
        %1190 = vxpose.xlu0.b32.cont [12/16] %v483, 128
        %1191 = vxpose.xlu0.b32.cont [13/16] %v488, 128
        %1192 = vxpose.xlu0.b32.cont [14/16] %v493, 128
        %1193 = vxpose.xlu0.b32.cont [15/16] %v498, 128
        %1194 = vxpose.xlu0.b32.end [16/16] %v503, 128
        %v1195 = vpop.trf.xlu0
        %v1196 = vpop.trf.xlu0
        %v1197 = vpop.trf.xlu0
        %v1198 = vpop.trf.xlu0
        %v1199 = vpop.trf.xlu0
        %v1200 = vpop.trf.xlu0
        %v1201 = vpop.trf.xlu0
        %v1202 = vpop.trf.xlu0
        %v1203 = vpop.trf.xlu0
        %v1204 = vpop.trf.xlu0
        %v1205 = vpop.trf.xlu0
        %v1206 = vpop.trf.xlu0
        %v1207 = vpop.trf.xlu0
        %v1208 = vpop.trf.xlu0
        %v1209 = vpop.trf.xlu0
        %v1210 = vpop.trf.xlu0
        %1211 = vxpose.xlu0.b32.start [1/16] %v429, 128
        %1212 = vxpose.xlu0.b32.cont [2/16] %v434, 128
        %1213 = vxpose.xlu0.b32.cont [3/16] %v439, 128
        %1214 = vxpose.xlu0.b32.cont [4/16] %v444, 128
        %1215 = vxpose.xlu0.b32.cont [5/16] %v449, 128
        %1216 = vxpose.xlu0.b32.cont [6/16] %v454, 128
        %1217 = vxpose.xlu0.b32.cont [7/16] %v459, 128
        %1218 = vxpose.xlu0.b32.cont [8/16] %v464, 128
        %1219 = vxpose.xlu0.b32.cont [9/16] %v469, 128
        %1220 = vxpose.xlu0.b32.cont [10/16] %v474, 128
        %1221 = vxpose.xlu0.b32.cont [11/16] %v479, 128
        %1222 = vxpose.xlu0.b32.cont [12/16] %v484, 128
        %1223 = vxpose.xlu0.b32.cont [13/16] %v489, 128
        %1224 = vxpose.xlu0.b32.cont [14/16] %v494, 128
        %1225 = vxpose.xlu0.b32.cont [15/16] %v499, 128
        %1226 = vxpose.xlu0.b32.end [16/16] %v504, 128
        %v1227 = vpop.trf.xlu0
        %v1228 = vpop.trf.xlu0
        %v1229 = vpop.trf.xlu0
        %v1230 = vpop.trf.xlu0
        %v1231 = vpop.trf.xlu0
        %v1232 = vpop.trf.xlu0
        %v1233 = vpop.trf.xlu0
        %v1234 = vpop.trf.xlu0
        %v1235 = vpop.trf.xlu0
        %v1236 = vpop.trf.xlu0
        %v1237 = vpop.trf.xlu0
        %v1238 = vpop.trf.xlu0
        %v1239 = vpop.trf.xlu0
        %v1240 = vpop.trf.xlu0
        %v1241 = vpop.trf.xlu0
        %v1242 = vpop.trf.xlu0
        %1243 = vxpose.xlu0.b32.start [1/16] %v430, 128
        %1244 = vxpose.xlu0.b32.cont [2/16] %v435, 128
        %1245 = vxpose.xlu0.b32.cont [3/16] %v440, 128
        %1246 = vxpose.xlu0.b32.cont [4/16] %v445, 128
        %1247 = vxpose.xlu0.b32.cont [5/16] %v450, 128
        %1248 = vxpose.xlu0.b32.cont [6/16] %v455, 128
        %1249 = vxpose.xlu0.b32.cont [7/16] %v460, 128
        %1250 = vxpose.xlu0.b32.cont [8/16] %v465, 128
        %1251 = vxpose.xlu0.b32.cont [9/16] %v470, 128
        %1252 = vxpose.xlu0.b32.cont [10/16] %v475, 128
        %1253 = vxpose.xlu0.b32.cont [11/16] %v480, 128
        %1254 = vxpose.xlu0.b32.cont [12/16] %v485, 128
        %1255 = vxpose.xlu0.b32.cont [13/16] %v490, 128
        %1256 = vxpose.xlu0.b32.cont [14/16] %v495, 128
        %1257 = vxpose.xlu0.b32.cont [15/16] %v500, 128
        %1258 = vxpose.xlu0.b32.end [16/16] %v505, 128
        %v1259 = vpop.trf.xlu0
        %v1260 = vpop.trf.xlu0
        %v1261 = vpop.trf.xlu0
        %v1262 = vpop.trf.xlu0
        %v1263 = vpop.trf.xlu0
        %v1264 = vpop.trf.xlu0
        %v1265 = vpop.trf.xlu0
        %v1266 = vpop.trf.xlu0
        %v1267 = vpop.trf.xlu0
        %v1268 = vpop.trf.xlu0
        %v1269 = vpop.trf.xlu0
        %v1270 = vpop.trf.xlu0
        %v1271 = vpop.trf.xlu0
        %v1272 = vpop.trf.xlu0
        %v1273 = vpop.trf.xlu0
        %v1274 = vpop.trf.xlu0
        %1275 = vxpose.xlu0.b32.start [1/16] %v431, 128
        %1276 = vxpose.xlu0.b32.cont [2/16] %v436, 128
        %1277 = vxpose.xlu0.b32.cont [3/16] %v441, 128
        %1278 = vxpose.xlu0.b32.cont [4/16] %v446, 128
        %1279 = vxpose.xlu0.b32.cont [5/16] %v451, 128
        %1280 = vxpose.xlu0.b32.cont [6/16] %v456, 128
        %1281 = vxpose.xlu0.b32.cont [7/16] %v461, 128
        %1282 = vxpose.xlu0.b32.cont [8/16] %v466, 128
        %1283 = vxpose.xlu0.b32.cont [9/16] %v471, 128
        %1284 = vxpose.xlu0.b32.cont [10/16] %v476, 128
        %1285 = vxpose.xlu0.b32.cont [11/16] %v481, 128
        %1286 = vxpose.xlu0.b32.cont [12/16] %v486, 128
        %1287 = vxpose.xlu0.b32.cont [13/16] %v491, 128
        %1288 = vxpose.xlu0.b32.cont [14/16] %v496, 128
        %1289 = vxpose.xlu0.b32.cont [15/16] %v501, 128
        %1290 = vxpose.xlu0.b32.end [16/16] %v506, 128
        %v1291 = vpop.trf.xlu0
        %v1292 = vpop.trf.xlu0
        %v1293 = vpop.trf.xlu0
        %v1294 = vpop.trf.xlu0
        %v1295 = vpop.trf.xlu0
        %v1296 = vpop.trf.xlu0
        %v1297 = vpop.trf.xlu0
        %v1298 = vpop.trf.xlu0
        %v1299 = vpop.trf.xlu0
        %v1300 = vpop.trf.xlu0
        %v1301 = vpop.trf.xlu0
        %v1302 = vpop.trf.xlu0
        %v1303 = vpop.trf.xlu0
        %v1304 = vpop.trf.xlu0
        %v1305 = vpop.trf.xlu0
        %v1306 = vpop.trf.xlu0
        %1307 = vxpose.xlu0.b32.start [1/16] %v507, 128
        %1308 = vxpose.xlu0.b32.cont [2/16] %v512, 128
        %1309 = vxpose.xlu0.b32.cont [3/16] %v517, 128
        %1310 = vxpose.xlu0.b32.cont [4/16] %v522, 128
        %1311 = vxpose.xlu0.b32.cont [5/16] %v527, 128
        %1312 = vxpose.xlu0.b32.cont [6/16] %v532, 128
        %1313 = vxpose.xlu0.b32.cont [7/16] %v537, 128
        %1314 = vxpose.xlu0.b32.cont [8/16] %v542, 128
        %1315 = vxpose.xlu0.b32.cont [9/16] %v547, 128
        %1316 = vxpose.xlu0.b32.cont [10/16] %v552, 128
        %1317 = vxpose.xlu0.b32.cont [11/16] %v557, 128
        %1318 = vxpose.xlu0.b32.cont [12/16] %v562, 128
        %1319 = vxpose.xlu0.b32.cont [13/16] %v567, 128
        %1320 = vxpose.xlu0.b32.cont [14/16] %v572, 128
        %1321 = vxpose.xlu0.b32.cont [15/16] %v577, 128
        %1322 = vxpose.xlu0.b32.end [16/16] %v582, 128
        %v1323 = vpop.trf.xlu0
        %v1324 = vpop.trf.xlu0
        %v1325 = vpop.trf.xlu0
        %v1326 = vpop.trf.xlu0
        %v1327 = vpop.trf.xlu0
        %v1328 = vpop.trf.xlu0
        %v1329 = vpop.trf.xlu0
        %v1330 = vpop.trf.xlu0
        %v1331 = vpop.trf.xlu0
        %v1332 = vpop.trf.xlu0
        %v1333 = vpop.trf.xlu0
        %v1334 = vpop.trf.xlu0
        %v1335 = vpop.trf.xlu0
        %v1336 = vpop.trf.xlu0
        %v1337 = vpop.trf.xlu0
        %v1338 = vpop.trf.xlu0
        %1339 = vxpose.xlu0.b32.start [1/16] %v508, 128
        %1340 = vxpose.xlu0.b32.cont [2/16] %v513, 128
        %1341 = vxpose.xlu0.b32.cont [3/16] %v518, 128
        %1342 = vxpose.xlu0.b32.cont [4/16] %v523, 128
        %1343 = vxpose.xlu0.b32.cont [5/16] %v528, 128
        %1344 = vxpose.xlu0.b32.cont [6/16] %v533, 128
        %1345 = vxpose.xlu0.b32.cont [7/16] %v538, 128
        %1346 = vxpose.xlu0.b32.cont [8/16] %v543, 128
        %1347 = vxpose.xlu0.b32.cont [9/16] %v548, 128
        %1348 = vxpose.xlu0.b32.cont [10/16] %v553, 128
        %1349 = vxpose.xlu0.b32.cont [11/16] %v558, 128
        %1350 = vxpose.xlu0.b32.cont [12/16] %v563, 128
        %1351 = vxpose.xlu0.b32.cont [13/16] %v568, 128
        %1352 = vxpose.xlu0.b32.cont [14/16] %v573, 128
        %1353 = vxpose.xlu0.b32.cont [15/16] %v578, 128
        %1354 = vxpose.xlu0.b32.end [16/16] %v583, 128
        %v1355 = vpop.trf.xlu0
        %v1356 = vpop.trf.xlu0
        %v1357 = vpop.trf.xlu0
        %v1358 = vpop.trf.xlu0
        %v1359 = vpop.trf.xlu0
        %v1360 = vpop.trf.xlu0
        %v1361 = vpop.trf.xlu0
        %v1362 = vpop.trf.xlu0
        %v1363 = vpop.trf.xlu0
        %v1364 = vpop.trf.xlu0
        %v1365 = vpop.trf.xlu0
        %v1366 = vpop.trf.xlu0
        %v1367 = vpop.trf.xlu0
        %v1368 = vpop.trf.xlu0
        %v1369 = vpop.trf.xlu0
        %v1370 = vpop.trf.xlu0
        %1371 = vxpose.xlu0.b32.start [1/16] %v509, 128
        %1372 = vxpose.xlu0.b32.cont [2/16] %v514, 128
        %1373 = vxpose.xlu0.b32.cont [3/16] %v519, 128
        %1374 = vxpose.xlu0.b32.cont [4/16] %v524, 128
        %1375 = vxpose.xlu0.b32.cont [5/16] %v529, 128
        %1376 = vxpose.xlu0.b32.cont [6/16] %v534, 128
        %1377 = vxpose.xlu0.b32.cont [7/16] %v539, 128
        %1378 = vxpose.xlu0.b32.cont [8/16] %v544, 128
        %1379 = vxpose.xlu0.b32.cont [9/16] %v549, 128
        %1380 = vxpose.xlu0.b32.cont [10/16] %v554, 128
        %1381 = vxpose.xlu0.b32.cont [11/16] %v559, 128
        %1382 = vxpose.xlu0.b32.cont [12/16] %v564, 128
        %1383 = vxpose.xlu0.b32.cont [13/16] %v569, 128
        %1384 = vxpose.xlu0.b32.cont [14/16] %v574, 128
        %1385 = vxpose.xlu0.b32.cont [15/16] %v579, 128
        %1386 = vxpose.xlu0.b32.end [16/16] %v584, 128
        %v1387 = vpop.trf.xlu0
        %v1388 = vpop.trf.xlu0
        %v1389 = vpop.trf.xlu0
        %v1390 = vpop.trf.xlu0
        %v1391 = vpop.trf.xlu0
        %v1392 = vpop.trf.xlu0
        %v1393 = vpop.trf.xlu0
        %v1394 = vpop.trf.xlu0
        %v1395 = vpop.trf.xlu0
        %v1396 = vpop.trf.xlu0
        %v1397 = vpop.trf.xlu0
        %v1398 = vpop.trf.xlu0
        %v1399 = vpop.trf.xlu0
        %v1400 = vpop.trf.xlu0
        %v1401 = vpop.trf.xlu0
        %v1402 = vpop.trf.xlu0
        %1403 = vxpose.xlu0.b32.start [1/16] %v510, 128
        %1404 = vxpose.xlu0.b32.cont [2/16] %v515, 128
        %1405 = vxpose.xlu0.b32.cont [3/16] %v520, 128
        %1406 = vxpose.xlu0.b32.cont [4/16] %v525, 128
        %1407 = vxpose.xlu0.b32.cont [5/16] %v530, 128
        %1408 = vxpose.xlu0.b32.cont [6/16] %v535, 128
        %1409 = vxpose.xlu0.b32.cont [7/16] %v540, 128
        %1410 = vxpose.xlu0.b32.cont [8/16] %v545, 128
        %1411 = vxpose.xlu0.b32.cont [9/16] %v550, 128
        %1412 = vxpose.xlu0.b32.cont [10/16] %v555, 128
        %1413 = vxpose.xlu0.b32.cont [11/16] %v560, 128
        %1414 = vxpose.xlu0.b32.cont [12/16] %v565, 128
        %1415 = vxpose.xlu0.b32.cont [13/16] %v570, 128
        %1416 = vxpose.xlu0.b32.cont [14/16] %v575, 128
        %1417 = vxpose.xlu0.b32.cont [15/16] %v580, 128
        %1418 = vxpose.xlu0.b32.end [16/16] %v585, 128
        %v1419 = vpop.trf.xlu0
        %v1420 = vpop.trf.xlu0
        %v1421 = vpop.trf.xlu0
        %v1422 = vpop.trf.xlu0
        %v1423 = vpop.trf.xlu0
        %v1424 = vpop.trf.xlu0
        %v1425 = vpop.trf.xlu0
        %v1426 = vpop.trf.xlu0
        %v1427 = vpop.trf.xlu0
        %v1428 = vpop.trf.xlu0
        %v1429 = vpop.trf.xlu0
        %v1430 = vpop.trf.xlu0
        %v1431 = vpop.trf.xlu0
        %v1432 = vpop.trf.xlu0
        %v1433 = vpop.trf.xlu0
        %v1434 = vpop.trf.xlu0
        %1435 = vxpose.xlu0.b32.start [1/16] %v511, 128
        %1436 = vxpose.xlu0.b32.cont [2/16] %v516, 128
        %1437 = vxpose.xlu0.b32.cont [3/16] %v521, 128
        %1438 = vxpose.xlu0.b32.cont [4/16] %v526, 128
        %1439 = vxpose.xlu0.b32.cont [5/16] %v531, 128
        %1440 = vxpose.xlu0.b32.cont [6/16] %v536, 128
        %1441 = vxpose.xlu0.b32.cont [7/16] %v541, 128
        %1442 = vxpose.xlu0.b32.cont [8/16] %v546, 128
        %1443 = vxpose.xlu0.b32.cont [9/16] %v551, 128
        %1444 = vxpose.xlu0.b32.cont [10/16] %v556, 128
        %1445 = vxpose.xlu0.b32.cont [11/16] %v561, 128
        %1446 = vxpose.xlu0.b32.cont [12/16] %v566, 128
        %1447 = vxpose.xlu0.b32.cont [13/16] %v571, 128
        %1448 = vxpose.xlu0.b32.cont [14/16] %v576, 128
        %1449 = vxpose.xlu0.b32.cont [15/16] %v581, 128
        %1450 = vxpose.xlu0.b32.end [16/16] %v586, 128
        %v1451 = vpop.trf.xlu0
        %v1452 = vpop.trf.xlu0
        %v1453 = vpop.trf.xlu0
        %v1454 = vpop.trf.xlu0
        %v1455 = vpop.trf.xlu0
        %v1456 = vpop.trf.xlu0
        %v1457 = vpop.trf.xlu0
        %v1458 = vpop.trf.xlu0
        %v1459 = vpop.trf.xlu0
        %v1460 = vpop.trf.xlu0
        %v1461 = vpop.trf.xlu0
        %v1462 = vpop.trf.xlu0
        %v1463 = vpop.trf.xlu0
        %v1464 = vpop.trf.xlu0
        %v1465 = vpop.trf.xlu0
        %v1466 = vpop.trf.xlu0
        %1467 = vxpose.xlu0.b32.start [1/16] %v587, 128
        %1468 = vxpose.xlu0.b32.cont [2/16] %v592, 128
        %1469 = vxpose.xlu0.b32.cont [3/16] %v597, 128
        %1470 = vxpose.xlu0.b32.cont [4/16] %v602, 128
        %1471 = vxpose.xlu0.b32.cont [5/16] %v607, 128
        %1472 = vxpose.xlu0.b32.cont [6/16] %v612, 128
        %1473 = vxpose.xlu0.b32.cont [7/16] %v617, 128
        %1474 = vxpose.xlu0.b32.cont [8/16] %v622, 128
        %1475 = vxpose.xlu0.b32.cont [9/16] %v627, 128
        %1476 = vxpose.xlu0.b32.cont [10/16] %v632, 128
        %1477 = vxpose.xlu0.b32.cont [11/16] %v637, 128
        %1478 = vxpose.xlu0.b32.cont [12/16] %v642, 128
        %1479 = vxpose.xlu0.b32.cont [13/16] %v647, 128
        %1480 = vxpose.xlu0.b32.cont [14/16] %v652, 128
        %1481 = vxpose.xlu0.b32.cont [15/16] %v657, 128
        %1482 = vxpose.xlu0.b32.end [16/16] %v662, 128
        %v1483 = vpop.trf.xlu0
        %v1484 = vpop.trf.xlu0
        %v1485 = vpop.trf.xlu0
        %v1486 = vpop.trf.xlu0
        %v1487 = vpop.trf.xlu0
        %v1488 = vpop.trf.xlu0
        %v1489 = vpop.trf.xlu0
        %v1490 = vpop.trf.xlu0
        %v1491 = vpop.trf.xlu0
        %v1492 = vpop.trf.xlu0
        %v1493 = vpop.trf.xlu0
        %v1494 = vpop.trf.xlu0
        %v1495 = vpop.trf.xlu0
        %v1496 = vpop.trf.xlu0
        %v1497 = vpop.trf.xlu0
        %v1498 = vpop.trf.xlu0
        %1499 = vxpose.xlu0.b32.start [1/16] %v588, 128
        %1500 = vxpose.xlu0.b32.cont [2/16] %v593, 128
        %1501 = vxpose.xlu0.b32.cont [3/16] %v598, 128
        %1502 = vxpose.xlu0.b32.cont [4/16] %v603, 128
        %1503 = vxpose.xlu0.b32.cont [5/16] %v608, 128
        %1504 = vxpose.xlu0.b32.cont [6/16] %v613, 128
        %1505 = vxpose.xlu0.b32.cont [7/16] %v618, 128
        %1506 = vxpose.xlu0.b32.cont [8/16] %v623, 128
        %1507 = vxpose.xlu0.b32.cont [9/16] %v628, 128
        %1508 = vxpose.xlu0.b32.cont [10/16] %v633, 128
        %1509 = vxpose.xlu0.b32.cont [11/16] %v638, 128
        %1510 = vxpose.xlu0.b32.cont [12/16] %v643, 128
        %1511 = vxpose.xlu0.b32.cont [13/16] %v648, 128
        %1512 = vxpose.xlu0.b32.cont [14/16] %v653, 128
        %1513 = vxpose.xlu0.b32.cont [15/16] %v658, 128
        %1514 = vxpose.xlu0.b32.end [16/16] %v663, 128
        %v1515 = vpop.trf.xlu0
        %v1516 = vpop.trf.xlu0
        %v1517 = vpop.trf.xlu0
        %v1518 = vpop.trf.xlu0
        %v1519 = vpop.trf.xlu0
        %v1520 = vpop.trf.xlu0
        %v1521 = vpop.trf.xlu0
        %v1522 = vpop.trf.xlu0
        %v1523 = vpop.trf.xlu0
        %v1524 = vpop.trf.xlu0
        %v1525 = vpop.trf.xlu0
        %v1526 = vpop.trf.xlu0
        %v1527 = vpop.trf.xlu0
        %v1528 = vpop.trf.xlu0
        %v1529 = vpop.trf.xlu0
        %v1530 = vpop.trf.xlu0
        %1531 = vxpose.xlu0.b32.start [1/16] %v589, 128
        %1532 = vxpose.xlu0.b32.cont [2/16] %v594, 128
        %1533 = vxpose.xlu0.b32.cont [3/16] %v599, 128
        %1534 = vxpose.xlu0.b32.cont [4/16] %v604, 128
        %1535 = vxpose.xlu0.b32.cont [5/16] %v609, 128
        %1536 = vxpose.xlu0.b32.cont [6/16] %v614, 128
        %1537 = vxpose.xlu0.b32.cont [7/16] %v619, 128
        %1538 = vxpose.xlu0.b32.cont [8/16] %v624, 128
        %1539 = vxpose.xlu0.b32.cont [9/16] %v629, 128
        %1540 = vxpose.xlu0.b32.cont [10/16] %v634, 128
        %1541 = vxpose.xlu0.b32.cont [11/16] %v639, 128
        %1542 = vxpose.xlu0.b32.cont [12/16] %v644, 128
        %1543 = vxpose.xlu0.b32.cont [13/16] %v649, 128
        %1544 = vxpose.xlu0.b32.cont [14/16] %v654, 128
        %1545 = vxpose.xlu0.b32.cont [15/16] %v659, 128
        %1546 = vxpose.xlu0.b32.end [16/16] %v664, 128
        %v1547 = vpop.trf.xlu0
        %v1548 = vpop.trf.xlu0
        %v1549 = vpop.trf.xlu0
        %v1550 = vpop.trf.xlu0
        %v1551 = vpop.trf.xlu0
        %v1552 = vpop.trf.xlu0
        %v1553 = vpop.trf.xlu0
        %v1554 = vpop.trf.xlu0
        %v1555 = vpop.trf.xlu0
        %v1556 = vpop.trf.xlu0
        %v1557 = vpop.trf.xlu0
        %v1558 = vpop.trf.xlu0
        %v1559 = vpop.trf.xlu0
        %v1560 = vpop.trf.xlu0
        %v1561 = vpop.trf.xlu0
        %v1562 = vpop.trf.xlu0
        %1563 = vxpose.xlu0.b32.start [1/16] %v590, 128
        %1564 = vxpose.xlu0.b32.cont [2/16] %v595, 128
        %1565 = vxpose.xlu0.b32.cont [3/16] %v600, 128
        %1566 = vxpose.xlu0.b32.cont [4/16] %v605, 128
        %1567 = vxpose.xlu0.b32.cont [5/16] %v610, 128
        %1568 = vxpose.xlu0.b32.cont [6/16] %v615, 128
        %1569 = vxpose.xlu0.b32.cont [7/16] %v620, 128
        %1570 = vxpose.xlu0.b32.cont [8/16] %v625, 128
        %1571 = vxpose.xlu0.b32.cont [9/16] %v630, 128
        %1572 = vxpose.xlu0.b32.cont [10/16] %v635, 128
        %1573 = vxpose.xlu0.b32.cont [11/16] %v640, 128
        %1574 = vxpose.xlu0.b32.cont [12/16] %v645, 128
        %1575 = vxpose.xlu0.b32.cont [13/16] %v650, 128
        %1576 = vxpose.xlu0.b32.cont [14/16] %v655, 128
        %1577 = vxpose.xlu0.b32.cont [15/16] %v660, 128
        %1578 = vxpose.xlu0.b32.end [16/16] %v665, 128
        %v1579 = vpop.trf.xlu0
        %v1580 = vpop.trf.xlu0
        %v1581 = vpop.trf.xlu0
        %v1582 = vpop.trf.xlu0
        %v1583 = vpop.trf.xlu0
        %v1584 = vpop.trf.xlu0
        %v1585 = vpop.trf.xlu0
        %v1586 = vpop.trf.xlu0
        %v1587 = vpop.trf.xlu0
        %v1588 = vpop.trf.xlu0
        %v1589 = vpop.trf.xlu0
        %v1590 = vpop.trf.xlu0
        %v1591 = vpop.trf.xlu0
        %v1592 = vpop.trf.xlu0
        %v1593 = vpop.trf.xlu0
        %v1594 = vpop.trf.xlu0
        %1595 = vxpose.xlu0.b32.start [1/16] %v591, 128
        %1596 = vxpose.xlu0.b32.cont [2/16] %v596, 128
        %1597 = vxpose.xlu0.b32.cont [3/16] %v601, 128
        %1598 = vxpose.xlu0.b32.cont [4/16] %v606, 128
        %1599 = vxpose.xlu0.b32.cont [5/16] %v611, 128
        %1600 = vxpose.xlu0.b32.cont [6/16] %v616, 128
        %1601 = vxpose.xlu0.b32.cont [7/16] %v621, 128
        %1602 = vxpose.xlu0.b32.cont [8/16] %v626, 128
        %1603 = vxpose.xlu0.b32.cont [9/16] %v631, 128
        %1604 = vxpose.xlu0.b32.cont [10/16] %v636, 128
        %1605 = vxpose.xlu0.b32.cont [11/16] %v641, 128
        %1606 = vxpose.xlu0.b32.cont [12/16] %v646, 128
        %1607 = vxpose.xlu0.b32.cont [13/16] %v651, 128
        %1608 = vxpose.xlu0.b32.cont [14/16] %v656, 128
        %1609 = vxpose.xlu0.b32.cont [15/16] %v661, 128
        %1610 = vxpose.xlu0.b32.end [16/16] %v666, 128
        %v1611 = vpop.trf.xlu0
        %v1612 = vpop.trf.xlu0
        %v1613 = vpop.trf.xlu0
        %v1614 = vpop.trf.xlu0
        %v1615 = vpop.trf.xlu0
        %v1616 = vpop.trf.xlu0
        %v1617 = vpop.trf.xlu0
        %v1618 = vpop.trf.xlu0
        %v1619 = vpop.trf.xlu0
        %v1620 = vpop.trf.xlu0
        %v1621 = vpop.trf.xlu0
        %v1622 = vpop.trf.xlu0
        %v1623 = vpop.trf.xlu0
        %v1624 = vpop.trf.xlu0
        %v1625 = vpop.trf.xlu0
        %v1626 = vpop.trf.xlu0
        %1627 = vst [vmem:[%s173] sm:$0xff] %v683
        %1628 = vst [vmem:[%s173 + $0x8] sm:$0xff] %v843
        %1629 = vst [vmem:[%s173 + $0x10] sm:$0xff] %v1003
        %1630 = vst [vmem:[%s173 + $0x18] sm:$0xff] %v1163
        %1631 = vst [vmem:[%s173 + $0x20] sm:$0xff] %v1323
        %1632 = vst [vmem:[%s173 + $0x28] sm:$0xff] %v1483
        %1633 = vst [vmem:[%s173 + $0x30] sm:$0xff] %v684
        %1634 = vst [vmem:[%s173 + $0x38] sm:$0xff] %v844
        %1635 = vst [vmem:[%s173 + $0x40] sm:$0xff] %v1004
        %1636 = vst [vmem:[%s173 + $0x48] sm:$0xff] %v1164
        %1637 = vst [vmem:[%s173 + $0x50] sm:$0xff] %v1324
        %1638 = vst [vmem:[%s173 + $0x58] sm:$0xff] %v1484
        %1639 = vst [vmem:[%s173 + $0x60] sm:$0xff] %v685
        %1640 = vst [vmem:[%s173 + $0x68] sm:$0xff] %v845
        %1641 = vst [vmem:[%s173 + $0x70] sm:$0xff] %v1005
        %1642 = vst [vmem:[%s173 + $0x78] sm:$0xff] %v1165
        %1643 = vst [vmem:[%s173 + $0x80] sm:$0xff] %v1325
        %1644 = vst [vmem:[%s173 + $0x88] sm:$0xff] %v1485
        %1645 = vst [vmem:[%s173 + $0x90] sm:$0xff] %v686
        %1646 = vst [vmem:[%s173 + $0x98] sm:$0xff] %v846
        %1647 = vst [vmem:[%s173 + $0xa0] sm:$0xff] %v1006
        %1648 = vst [vmem:[%s173 + $0xa8] sm:$0xff] %v1166
        %1649 = vst [vmem:[%s173 + $0xb0] sm:$0xff] %v1326
        %1650 = vst [vmem:[%s173 + $0xb8] sm:$0xff] %v1486
        %1651 = vst [vmem:[%s173 + $0xc0] sm:$0xff] %v687
        %1652 = vst [vmem:[%s173 + $0xc8] sm:$0xff] %v847
        %1653 = vst [vmem:[%s173 + $0xd0] sm:$0xff] %v1007
        %1654 = vst [vmem:[%s173 + $0xd8] sm:$0xff] %v1167
        %1655 = vst [vmem:[%s173 + $0xe0] sm:$0xff] %v1327
        %1656 = vst [vmem:[%s173 + $0xe8] sm:$0xff] %v1487
        %1657 = vst [vmem:[%s173 + $0xf0] sm:$0xff] %v688
        %1658 = vst [vmem:[%s173 + $0xf8] sm:$0xff] %v848
        %1659 = vst [vmem:[%s173 + $0x100] sm:$0xff] %v1008
        %1660 = vst [vmem:[%s173 + $0x108] sm:$0xff] %v1168
        %1661 = vst [vmem:[%s173 + $0x110] sm:$0xff] %v1328
        %1662 = vst [vmem:[%s173 + $0x118] sm:$0xff] %v1488
        %1663 = vst [vmem:[%s173 + $0x120] sm:$0xff] %v689
        %1664 = vst [vmem:[%s173 + $0x128] sm:$0xff] %v849
        %1665 = vst [vmem:[%s173 + $0x130] sm:$0xff] %v1009
        %1666 = vst [vmem:[%s173 + $0x138] sm:$0xff] %v1169
        %1667 = vst [vmem:[%s173 + $0x140] sm:$0xff] %v1329
        %1668 = vst [vmem:[%s173 + $0x148] sm:$0xff] %v1489
        %1669 = vst [vmem:[%s173 + $0x150] sm:$0xff] %v690
        %1670 = vst [vmem:[%s173 + $0x158] sm:$0xff] %v850
        %1671 = vst [vmem:[%s173 + $0x160] sm:$0xff] %v1010
        %1672 = vst [vmem:[%s173 + $0x168] sm:$0xff] %v1170
        %1673 = vst [vmem:[%s173 + $0x170] sm:$0xff] %v1330
        %1674 = vst [vmem:[%s173 + $0x178] sm:$0xff] %v1490
        %1675 = vst [vmem:[%s173 + $0x180] sm:$0xff] %v691
        %1676 = vst [vmem:[%s173 + $0x188] sm:$0xff] %v851
        %1677 = vst [vmem:[%s173 + $0x190] sm:$0xff] %v1011
        %1678 = vst [vmem:[%s173 + $0x198] sm:$0xff] %v1171
        %1679 = vst [vmem:[%s173 + $0x1a0] sm:$0xff] %v1331
        %1680 = vst [vmem:[%s173 + $0x1a8] sm:$0xff] %v1491
        %1681 = vst [vmem:[%s173 + $0x1b0] sm:$0xff] %v692
        %1682 = vst [vmem:[%s173 + $0x1b8] sm:$0xff] %v852
        %1683 = vst [vmem:[%s173 + $0x1c0] sm:$0xff] %v1012
        %1684 = vst [vmem:[%s173 + $0x1c8] sm:$0xff] %v1172
        %1685 = vst [vmem:[%s173 + $0x1d0] sm:$0xff] %v1332
        %1686 = vst [vmem:[%s173 + $0x1d8] sm:$0xff] %v1492
        %1687 = vst [vmem:[%s173 + $0x1e0] sm:$0xff] %v693
        %1688 = vst [vmem:[%s173 + $0x1e8] sm:$0xff] %v853
        %1689 = vst [vmem:[%s173 + $0x1f0] sm:$0xff] %v1013
        %1690 = vst [vmem:[%s173 + $0x1f8] sm:$0xff] %v1173
        %1691 = vst [vmem:[%s173 + $0x200] sm:$0xff] %v1333
        %1692 = vst [vmem:[%s173 + $0x208] sm:$0xff] %v1493
        %1693 = vst [vmem:[%s173 + $0x210] sm:$0xff] %v694
        %1694 = vst [vmem:[%s173 + $0x218] sm:$0xff] %v854
        %1695 = vst [vmem:[%s173 + $0x220] sm:$0xff] %v1014
        %1696 = vst [vmem:[%s173 + $0x228] sm:$0xff] %v1174
        %1697 = vst [vmem:[%s173 + $0x230] sm:$0xff] %v1334
        %1698 = vst [vmem:[%s173 + $0x238] sm:$0xff] %v1494
        %1699 = vst [vmem:[%s173 + $0x240] sm:$0xff] %v695
        %1700 = vst [vmem:[%s173 + $0x248] sm:$0xff] %v855
        %1701 = vst [vmem:[%s173 + $0x250] sm:$0xff] %v1015
        %1702 = vst [vmem:[%s173 + $0x258] sm:$0xff] %v1175
        %1703 = vst [vmem:[%s173 + $0x260] sm:$0xff] %v1335
        %1704 = vst [vmem:[%s173 + $0x268] sm:$0xff] %v1495
        %1705 = vst [vmem:[%s173 + $0x270] sm:$0xff] %v696
        %1706 = vst [vmem:[%s173 + $0x278] sm:$0xff] %v856
        %1707 = vst [vmem:[%s173 + $0x280] sm:$0xff] %v1016
        %1708 = vst [vmem:[%s173 + $0x288] sm:$0xff] %v1176
        %1709 = vst [vmem:[%s173 + $0x290] sm:$0xff] %v1336
        %1710 = vst [vmem:[%s173 + $0x298] sm:$0xff] %v1496
        %1711 = vst [vmem:[%s173 + $0x2a0] sm:$0xff] %v697
        %1712 = vst [vmem:[%s173 + $0x2a8] sm:$0xff] %v857
        %1713 = vst [vmem:[%s173 + $0x2b0] sm:$0xff] %v1017
        %1714 = vst [vmem:[%s173 + $0x2b8] sm:$0xff] %v1177
        %1715 = vst [vmem:[%s173 + $0x2c0] sm:$0xff] %v1337
        %1716 = vst [vmem:[%s173 + $0x2c8] sm:$0xff] %v1497
        %1717 = vst [vmem:[%s173 + $0x2d0] sm:$0xff] %v698
        %1718 = vst [vmem:[%s173 + $0x2d8] sm:$0xff] %v858
        %1719 = vst [vmem:[%s173 + $0x2e0] sm:$0xff] %v1018
        %1720 = vst [vmem:[%s173 + $0x2e8] sm:$0xff] %v1178
        %1721 = vst [vmem:[%s173 + $0x2f0] sm:$0xff] %v1338
        %1722 = vst [vmem:[%s173 + $0x2f8] sm:$0xff] %v1498
        %1723 = vst [vmem:[%s173 + $0x300] sm:$0xff] %v715
        %1724 = vst [vmem:[%s173 + $0x308] sm:$0xff] %v875
        %1725 = vst [vmem:[%s173 + $0x310] sm:$0xff] %v1035
        %1726 = vst [vmem:[%s173 + $0x318] sm:$0xff] %v1195
        %1727 = vst [vmem:[%s173 + $0x320] sm:$0xff] %v1355
        %1728 = vst [vmem:[%s173 + $0x328] sm:$0xff] %v1515
        %1729 = vst [vmem:[%s173 + $0x330] sm:$0xff] %v716
        %1730 = vst [vmem:[%s173 + $0x338] sm:$0xff] %v876
        %1731 = vst [vmem:[%s173 + $0x340] sm:$0xff] %v1036
        %1732 = vst [vmem:[%s173 + $0x348] sm:$0xff] %v1196
        %1733 = vst [vmem:[%s173 + $0x350] sm:$0xff] %v1356
        %1734 = vst [vmem:[%s173 + $0x358] sm:$0xff] %v1516
        %1735 = vst [vmem:[%s173 + $0x360] sm:$0xff] %v717
        %1736 = vst [vmem:[%s173 + $0x368] sm:$0xff] %v877
        %1737 = vst [vmem:[%s173 + $0x370] sm:$0xff] %v1037
        %1738 = vst [vmem:[%s173 + $0x378] sm:$0xff] %v1197
        %1739 = vst [vmem:[%s173 + $0x380] sm:$0xff] %v1357
        %1740 = vst [vmem:[%s173 + $0x388] sm:$0xff] %v1517
        %1741 = vst [vmem:[%s173 + $0x390] sm:$0xff] %v718
        %1742 = vst [vmem:[%s173 + $0x398] sm:$0xff] %v878
        %1743 = vst [vmem:[%s173 + $0x3a0] sm:$0xff] %v1038
        %1744 = vst [vmem:[%s173 + $0x3a8] sm:$0xff] %v1198
        %1745 = vst [vmem:[%s173 + $0x3b0] sm:$0xff] %v1358
        %1746 = vst [vmem:[%s173 + $0x3b8] sm:$0xff] %v1518
        %1747 = vst [vmem:[%s173 + $0x3c0] sm:$0xff] %v719
        %1748 = vst [vmem:[%s173 + $0x3c8] sm:$0xff] %v879
        %1749 = vst [vmem:[%s173 + $0x3d0] sm:$0xff] %v1039
        %1750 = vst [vmem:[%s173 + $0x3d8] sm:$0xff] %v1199
        %1751 = vst [vmem:[%s173 + $0x3e0] sm:$0xff] %v1359
        %1752 = vst [vmem:[%s173 + $0x3e8] sm:$0xff] %v1519
        %1753 = vst [vmem:[%s173 + $0x3f0] sm:$0xff] %v720
        %1754 = vst [vmem:[%s173 + $0x3f8] sm:$0xff] %v880
        %1755 = vst [vmem:[%s173 + $0x400] sm:$0xff] %v1040
        %1756 = vst [vmem:[%s173 + $0x408] sm:$0xff] %v1200
        %1757 = vst [vmem:[%s173 + $0x410] sm:$0xff] %v1360
        %1758 = vst [vmem:[%s173 + $0x418] sm:$0xff] %v1520
        %1759 = vst [vmem:[%s173 + $0x420] sm:$0xff] %v721
        %1760 = vst [vmem:[%s173 + $0x428] sm:$0xff] %v881
        %1761 = vst [vmem:[%s173 + $0x430] sm:$0xff] %v1041
        %1762 = vst [vmem:[%s173 + $0x438] sm:$0xff] %v1201
        %1763 = vst [vmem:[%s173 + $0x440] sm:$0xff] %v1361
        %1764 = vst [vmem:[%s173 + $0x448] sm:$0xff] %v1521
        %1765 = vst [vmem:[%s173 + $0x450] sm:$0xff] %v722
        %1766 = vst [vmem:[%s173 + $0x458] sm:$0xff] %v882
        %1767 = vst [vmem:[%s173 + $0x460] sm:$0xff] %v1042
        %1768 = vst [vmem:[%s173 + $0x468] sm:$0xff] %v1202
        %1769 = vst [vmem:[%s173 + $0x470] sm:$0xff] %v1362
        %1770 = vst [vmem:[%s173 + $0x478] sm:$0xff] %v1522
        %1771 = vst [vmem:[%s173 + $0x480] sm:$0xff] %v723
        %1772 = vst [vmem:[%s173 + $0x488] sm:$0xff] %v883
        %1773 = vst [vmem:[%s173 + $0x490] sm:$0xff] %v1043
        %1774 = vst [vmem:[%s173 + $0x498] sm:$0xff] %v1203
        %1775 = vst [vmem:[%s173 + $0x4a0] sm:$0xff] %v1363
        %1776 = vst [vmem:[%s173 + $0x4a8] sm:$0xff] %v1523
        %1777 = vst [vmem:[%s173 + $0x4b0] sm:$0xff] %v724
        %1778 = vst [vmem:[%s173 + $0x4b8] sm:$0xff] %v884
        %1779 = vst [vmem:[%s173 + $0x4c0] sm:$0xff] %v1044
        %1780 = vst [vmem:[%s173 + $0x4c8] sm:$0xff] %v1204
        %1781 = vst [vmem:[%s173 + $0x4d0] sm:$0xff] %v1364
        %1782 = vst [vmem:[%s173 + $0x4d8] sm:$0xff] %v1524
        %1783 = vst [vmem:[%s173 + $0x4e0] sm:$0xff] %v725
        %1784 = vst [vmem:[%s173 + $0x4e8] sm:$0xff] %v885
        %1785 = vst [vmem:[%s173 + $0x4f0] sm:$0xff] %v1045
        %1786 = vst [vmem:[%s173 + $0x4f8] sm:$0xff] %v1205
        %1787 = vst [vmem:[%s173 + $0x500] sm:$0xff] %v1365
        %1788 = vst [vmem:[%s173 + $0x508] sm:$0xff] %v1525
        %1789 = vst [vmem:[%s173 + $0x510] sm:$0xff] %v726
        %1790 = vst [vmem:[%s173 + $0x518] sm:$0xff] %v886
        %1791 = vst [vmem:[%s173 + $0x520] sm:$0xff] %v1046
        %1792 = vst [vmem:[%s173 + $0x528] sm:$0xff] %v1206
        %1793 = vst [vmem:[%s173 + $0x530] sm:$0xff] %v1366
        %1794 = vst [vmem:[%s173 + $0x538] sm:$0xff] %v1526
        %1795 = vst [vmem:[%s173 + $0x540] sm:$0xff] %v727
        %1796 = vst [vmem:[%s173 + $0x548] sm:$0xff] %v887
        %1797 = vst [vmem:[%s173 + $0x550] sm:$0xff] %v1047
        %1798 = vst [vmem:[%s173 + $0x558] sm:$0xff] %v1207
        %1799 = vst [vmem:[%s173 + $0x560] sm:$0xff] %v1367
        %1800 = vst [vmem:[%s173 + $0x568] sm:$0xff] %v1527
        %1801 = vst [vmem:[%s173 + $0x570] sm:$0xff] %v728
        %1802 = vst [vmem:[%s173 + $0x578] sm:$0xff] %v888
        %1803 = vst [vmem:[%s173 + $0x580] sm:$0xff] %v1048
        %1804 = vst [vmem:[%s173 + $0x588] sm:$0xff] %v1208
        %1805 = vst [vmem:[%s173 + $0x590] sm:$0xff] %v1368
        %1806 = vst [vmem:[%s173 + $0x598] sm:$0xff] %v1528
        %1807 = vst [vmem:[%s173 + $0x5a0] sm:$0xff] %v729
        %1808 = vst [vmem:[%s173 + $0x5a8] sm:$0xff] %v889
        %1809 = vst [vmem:[%s173 + $0x5b0] sm:$0xff] %v1049
        %1810 = vst [vmem:[%s173 + $0x5b8] sm:$0xff] %v1209
        %1811 = vst [vmem:[%s173 + $0x5c0] sm:$0xff] %v1369
        %1812 = vst [vmem:[%s173 + $0x5c8] sm:$0xff] %v1529
        %1813 = vst [vmem:[%s173 + $0x5d0] sm:$0xff] %v730
        %1814 = vst [vmem:[%s173 + $0x5d8] sm:$0xff] %v890
        %1815 = vst [vmem:[%s173 + $0x5e0] sm:$0xff] %v1050
        %1816 = vst [vmem:[%s173 + $0x5e8] sm:$0xff] %v1210
        %1817 = vst [vmem:[%s173 + $0x5f0] sm:$0xff] %v1370
        %1818 = vst [vmem:[%s173 + $0x5f8] sm:$0xff] %v1530
        %1819 = vst [vmem:[%s173 + $0x600] sm:$0xff] %v747
        %1820 = vst [vmem:[%s173 + $0x608] sm:$0xff] %v907
        %1821 = vst [vmem:[%s173 + $0x610] sm:$0xff] %v1067
        %1822 = vst [vmem:[%s173 + $0x618] sm:$0xff] %v1227
        %1823 = vst [vmem:[%s173 + $0x620] sm:$0xff] %v1387
        %1824 = vst [vmem:[%s173 + $0x628] sm:$0xff] %v1547
        %1825 = vst [vmem:[%s173 + $0x630] sm:$0xff] %v748
        %1826 = vst [vmem:[%s173 + $0x638] sm:$0xff] %v908
        %1827 = vst [vmem:[%s173 + $0x640] sm:$0xff] %v1068
        %1828 = vst [vmem:[%s173 + $0x648] sm:$0xff] %v1228
        %1829 = vst [vmem:[%s173 + $0x650] sm:$0xff] %v1388
        %1830 = vst [vmem:[%s173 + $0x658] sm:$0xff] %v1548
        %1831 = vst [vmem:[%s173 + $0x660] sm:$0xff] %v749
        %1832 = vst [vmem:[%s173 + $0x668] sm:$0xff] %v909
        %1833 = vst [vmem:[%s173 + $0x670] sm:$0xff] %v1069
        %1834 = vst [vmem:[%s173 + $0x678] sm:$0xff] %v1229
        %1835 = vst [vmem:[%s173 + $0x680] sm:$0xff] %v1389
        %1836 = vst [vmem:[%s173 + $0x688] sm:$0xff] %v1549
        %1837 = vst [vmem:[%s173 + $0x690] sm:$0xff] %v750
        %1838 = vst [vmem:[%s173 + $0x698] sm:$0xff] %v910
        %1839 = vst [vmem:[%s173 + $0x6a0] sm:$0xff] %v1070
        %1840 = vst [vmem:[%s173 + $0x6a8] sm:$0xff] %v1230
        %1841 = vst [vmem:[%s173 + $0x6b0] sm:$0xff] %v1390
        %1842 = vst [vmem:[%s173 + $0x6b8] sm:$0xff] %v1550
        %1843 = vst [vmem:[%s173 + $0x6c0] sm:$0xff] %v751
        %1844 = vst [vmem:[%s173 + $0x6c8] sm:$0xff] %v911
        %1845 = vst [vmem:[%s173 + $0x6d0] sm:$0xff] %v1071
        %1846 = vst [vmem:[%s173 + $0x6d8] sm:$0xff] %v1231
        %1847 = vst [vmem:[%s173 + $0x6e0] sm:$0xff] %v1391
        %1848 = vst [vmem:[%s173 + $0x6e8] sm:$0xff] %v1551
        %1849 = vst [vmem:[%s173 + $0x6f0] sm:$0xff] %v752
        %1850 = vst [vmem:[%s173 + $0x6f8] sm:$0xff] %v912
        %1851 = vst [vmem:[%s173 + $0x700] sm:$0xff] %v1072
        %1852 = vst [vmem:[%s173 + $0x708] sm:$0xff] %v1232
        %1853 = vst [vmem:[%s173 + $0x710] sm:$0xff] %v1392
        %1854 = vst [vmem:[%s173 + $0x718] sm:$0xff] %v1552
        %1855 = vst [vmem:[%s173 + $0x720] sm:$0xff] %v753
        %1856 = vst [vmem:[%s173 + $0x728] sm:$0xff] %v913
        %1857 = vst [vmem:[%s173 + $0x730] sm:$0xff] %v1073
        %1858 = vst [vmem:[%s173 + $0x738] sm:$0xff] %v1233
        %1859 = vst [vmem:[%s173 + $0x740] sm:$0xff] %v1393
        %1860 = vst [vmem:[%s173 + $0x748] sm:$0xff] %v1553
        %1861 = vst [vmem:[%s173 + $0x750] sm:$0xff] %v754
        %1862 = vst [vmem:[%s173 + $0x758] sm:$0xff] %v914
        %1863 = vst [vmem:[%s173 + $0x760] sm:$0xff] %v1074
        %1864 = vst [vmem:[%s173 + $0x768] sm:$0xff] %v1234
        %1865 = vst [vmem:[%s173 + $0x770] sm:$0xff] %v1394
        %1866 = vst [vmem:[%s173 + $0x778] sm:$0xff] %v1554
        %1867 = vst [vmem:[%s173 + $0x780] sm:$0xff] %v755
        %1868 = vst [vmem:[%s173 + $0x788] sm:$0xff] %v915
        %1869 = vst [vmem:[%s173 + $0x790] sm:$0xff] %v1075
        %1870 = vst [vmem:[%s173 + $0x798] sm:$0xff] %v1235
        %1871 = vst [vmem:[%s173 + $0x7a0] sm:$0xff] %v1395
        %1872 = vst [vmem:[%s173 + $0x7a8] sm:$0xff] %v1555
        %1873 = vst [vmem:[%s173 + $0x7b0] sm:$0xff] %v756
        %1874 = vst [vmem:[%s173 + $0x7b8] sm:$0xff] %v916
        %1875 = vst [vmem:[%s173 + $0x7c0] sm:$0xff] %v1076
        %1876 = vst [vmem:[%s173 + $0x7c8] sm:$0xff] %v1236
        %1877 = vst [vmem:[%s173 + $0x7d0] sm:$0xff] %v1396
        %1878 = vst [vmem:[%s173 + $0x7d8] sm:$0xff] %v1556
        %1879 = vst [vmem:[%s173 + $0x7e0] sm:$0xff] %v757
        %1880 = vst [vmem:[%s173 + $0x7e8] sm:$0xff] %v917
        %1881 = vst [vmem:[%s173 + $0x7f0] sm:$0xff] %v1077
        %1882 = vst [vmem:[%s173 + $0x7f8] sm:$0xff] %v1237
        %1883 = vst [vmem:[%s173 + $0x800] sm:$0xff] %v1397
        %1884 = vst [vmem:[%s173 + $0x808] sm:$0xff] %v1557
        %1885 = vst [vmem:[%s173 + $0x810] sm:$0xff] %v758
        %1886 = vst [vmem:[%s173 + $0x818] sm:$0xff] %v918
        %1887 = vst [vmem:[%s173 + $0x820] sm:$0xff] %v1078
        %1888 = vst [vmem:[%s173 + $0x828] sm:$0xff] %v1238
        %1889 = vst [vmem:[%s173 + $0x830] sm:$0xff] %v1398
        %1890 = vst [vmem:[%s173 + $0x838] sm:$0xff] %v1558
        %1891 = vst [vmem:[%s173 + $0x840] sm:$0xff] %v759
        %1892 = vst [vmem:[%s173 + $0x848] sm:$0xff] %v919
        %1893 = vst [vmem:[%s173 + $0x850] sm:$0xff] %v1079
        %1894 = vst [vmem:[%s173 + $0x858] sm:$0xff] %v1239
        %1895 = vst [vmem:[%s173 + $0x860] sm:$0xff] %v1399
        %1896 = vst [vmem:[%s173 + $0x868] sm:$0xff] %v1559
        %1897 = vst [vmem:[%s173 + $0x870] sm:$0xff] %v760
        %1898 = vst [vmem:[%s173 + $0x878] sm:$0xff] %v920
        %1899 = vst [vmem:[%s173 + $0x880] sm:$0xff] %v1080
        %1900 = vst [vmem:[%s173 + $0x888] sm:$0xff] %v1240
        %1901 = vst [vmem:[%s173 + $0x890] sm:$0xff] %v1400
        %1902 = vst [vmem:[%s173 + $0x898] sm:$0xff] %v1560
        %1903 = vst [vmem:[%s173 + $0x8a0] sm:$0xff] %v761
        %1904 = vst [vmem:[%s173 + $0x8a8] sm:$0xff] %v921
        %1905 = vst [vmem:[%s173 + $0x8b0] sm:$0xff] %v1081
        %1906 = vst [vmem:[%s173 + $0x8b8] sm:$0xff] %v1241
        %1907 = vst [vmem:[%s173 + $0x8c0] sm:$0xff] %v1401
        %1908 = vst [vmem:[%s173 + $0x8c8] sm:$0xff] %v1561
        %1909 = vst [vmem:[%s173 + $0x8d0] sm:$0xff] %v762
        %1910 = vst [vmem:[%s173 + $0x8d8] sm:$0xff] %v922
        %1911 = vst [vmem:[%s173 + $0x8e0] sm:$0xff] %v1082
        %1912 = vst [vmem:[%s173 + $0x8e8] sm:$0xff] %v1242
        %1913 = vst [vmem:[%s173 + $0x8f0] sm:$0xff] %v1402
        %1914 = vst [vmem:[%s173 + $0x8f8] sm:$0xff] %v1562
        %1915 = vst [vmem:[%s173 + $0x900] sm:$0xff] %v779
        %1916 = vst [vmem:[%s173 + $0x908] sm:$0xff] %v939
        %1917 = vst [vmem:[%s173 + $0x910] sm:$0xff] %v1099
        %1918 = vst [vmem:[%s173 + $0x918] sm:$0xff] %v1259
        %1919 = vst [vmem:[%s173 + $0x920] sm:$0xff] %v1419
        %1920 = vst [vmem:[%s173 + $0x928] sm:$0xff] %v1579
        %1921 = vst [vmem:[%s173 + $0x930] sm:$0xff] %v780
        %1922 = vst [vmem:[%s173 + $0x938] sm:$0xff] %v940
        %1923 = vst [vmem:[%s173 + $0x940] sm:$0xff] %v1100
        %1924 = vst [vmem:[%s173 + $0x948] sm:$0xff] %v1260
        %1925 = vst [vmem:[%s173 + $0x950] sm:$0xff] %v1420
        %1926 = vst [vmem:[%s173 + $0x958] sm:$0xff] %v1580
        %1927 = vst [vmem:[%s173 + $0x960] sm:$0xff] %v781
        %1928 = vst [vmem:[%s173 + $0x968] sm:$0xff] %v941
        %1929 = vst [vmem:[%s173 + $0x970] sm:$0xff] %v1101
        %1930 = vst [vmem:[%s173 + $0x978] sm:$0xff] %v1261
        %1931 = vst [vmem:[%s173 + $0x980] sm:$0xff] %v1421
        %1932 = vst [vmem:[%s173 + $0x988] sm:$0xff] %v1581
        %1933 = vst [vmem:[%s173 + $0x990] sm:$0xff] %v782
        %1934 = vst [vmem:[%s173 + $0x998] sm:$0xff] %v942
        %1935 = vst [vmem:[%s173 + $0x9a0] sm:$0xff] %v1102
        %1936 = vst [vmem:[%s173 + $0x9a8] sm:$0xff] %v1262
        %1937 = vst [vmem:[%s173 + $0x9b0] sm:$0xff] %v1422
        %1938 = vst [vmem:[%s173 + $0x9b8] sm:$0xff] %v1582
        %1939 = vst [vmem:[%s173 + $0x9c0] sm:$0xff] %v783
        %1940 = vst [vmem:[%s173 + $0x9c8] sm:$0xff] %v943
        %1941 = vst [vmem:[%s173 + $0x9d0] sm:$0xff] %v1103
        %1942 = vst [vmem:[%s173 + $0x9d8] sm:$0xff] %v1263
        %1943 = vst [vmem:[%s173 + $0x9e0] sm:$0xff] %v1423
        %1944 = vst [vmem:[%s173 + $0x9e8] sm:$0xff] %v1583
        %1945 = vst [vmem:[%s173 + $0x9f0] sm:$0xff] %v784
        %1946 = vst [vmem:[%s173 + $0x9f8] sm:$0xff] %v944
        %1947 = vst [vmem:[%s173 + $0xa00] sm:$0xff] %v1104
        %1948 = vst [vmem:[%s173 + $0xa08] sm:$0xff] %v1264
        %1949 = vst [vmem:[%s173 + $0xa10] sm:$0xff] %v1424
        %1950 = vst [vmem:[%s173 + $0xa18] sm:$0xff] %v1584
        %1951 = vst [vmem:[%s173 + $0xa20] sm:$0xff] %v785
        %1952 = vst [vmem:[%s173 + $0xa28] sm:$0xff] %v945
        %1953 = vst [vmem:[%s173 + $0xa30] sm:$0xff] %v1105
        %1954 = vst [vmem:[%s173 + $0xa38] sm:$0xff] %v1265
        %1955 = vst [vmem:[%s173 + $0xa40] sm:$0xff] %v1425
        %1956 = vst [vmem:[%s173 + $0xa48] sm:$0xff] %v1585
        %1957 = vst [vmem:[%s173 + $0xa50] sm:$0xff] %v786
        %1958 = vst [vmem:[%s173 + $0xa58] sm:$0xff] %v946
        %1959 = vst [vmem:[%s173 + $0xa60] sm:$0xff] %v1106
        %1960 = vst [vmem:[%s173 + $0xa68] sm:$0xff] %v1266
        %1961 = vst [vmem:[%s173 + $0xa70] sm:$0xff] %v1426
        %1962 = vst [vmem:[%s173 + $0xa78] sm:$0xff] %v1586
        %1963 = vst [vmem:[%s173 + $0xa80] sm:$0xff] %v787
        %1964 = vst [vmem:[%s173 + $0xa88] sm:$0xff] %v947
        %1965 = vst [vmem:[%s173 + $0xa90] sm:$0xff] %v1107
        %1966 = vst [vmem:[%s173 + $0xa98] sm:$0xff] %v1267
        %1967 = vst [vmem:[%s173 + $0xaa0] sm:$0xff] %v1427
        %1968 = vst [vmem:[%s173 + $0xaa8] sm:$0xff] %v1587
        %1969 = vst [vmem:[%s173 + $0xab0] sm:$0xff] %v788
        %1970 = vst [vmem:[%s173 + $0xab8] sm:$0xff] %v948
        %1971 = vst [vmem:[%s173 + $0xac0] sm:$0xff] %v1108
        %1972 = vst [vmem:[%s173 + $0xac8] sm:$0xff] %v1268
        %1973 = vst [vmem:[%s173 + $0xad0] sm:$0xff] %v1428
        %1974 = vst [vmem:[%s173 + $0xad8] sm:$0xff] %v1588
        %1975 = vst [vmem:[%s173 + $0xae0] sm:$0xff] %v789
        %1976 = vst [vmem:[%s173 + $0xae8] sm:$0xff] %v949
        %1977 = vst [vmem:[%s173 + $0xaf0] sm:$0xff] %v1109
        %1978 = vst [vmem:[%s173 + $0xaf8] sm:$0xff] %v1269
        %1979 = vst [vmem:[%s173 + $0xb00] sm:$0xff] %v1429
        %1980 = vst [vmem:[%s173 + $0xb08] sm:$0xff] %v1589
        %1981 = vst [vmem:[%s173 + $0xb10] sm:$0xff] %v790
        %1982 = vst [vmem:[%s173 + $0xb18] sm:$0xff] %v950
        %1983 = vst [vmem:[%s173 + $0xb20] sm:$0xff] %v1110
        %1984 = vst [vmem:[%s173 + $0xb28] sm:$0xff] %v1270
        %1985 = vst [vmem:[%s173 + $0xb30] sm:$0xff] %v1430
        %1986 = vst [vmem:[%s173 + $0xb38] sm:$0xff] %v1590
        %1987 = vst [vmem:[%s173 + $0xb40] sm:$0xff] %v791
        %1988 = vst [vmem:[%s173 + $0xb48] sm:$0xff] %v951
        %1989 = vst [vmem:[%s173 + $0xb50] sm:$0xff] %v1111
        %1990 = vst [vmem:[%s173 + $0xb58] sm:$0xff] %v1271
        %1991 = vst [vmem:[%s173 + $0xb60] sm:$0xff] %v1431
        %1992 = vst [vmem:[%s173 + $0xb68] sm:$0xff] %v1591
        %1993 = vst [vmem:[%s173 + $0xb70] sm:$0xff] %v792
        %1994 = vst [vmem:[%s173 + $0xb78] sm:$0xff] %v952
        %1995 = vst [vmem:[%s173 + $0xb80] sm:$0xff] %v1112
        %1996 = vst [vmem:[%s173 + $0xb88] sm:$0xff] %v1272
        %1997 = vst [vmem:[%s173 + $0xb90] sm:$0xff] %v1432
        %1998 = vst [vmem:[%s173 + $0xb98] sm:$0xff] %v1592
        %1999 = vst [vmem:[%s173 + $0xba0] sm:$0xff] %v793
        %2000 = vst [vmem:[%s173 + $0xba8] sm:$0xff] %v953
        %2001 = vst [vmem:[%s173 + $0xbb0] sm:$0xff] %v1113
        %2002 = vst [vmem:[%s173 + $0xbb8] sm:$0xff] %v1273
        %2003 = vst [vmem:[%s173 + $0xbc0] sm:$0xff] %v1433
        %2004 = vst [vmem:[%s173 + $0xbc8] sm:$0xff] %v1593
        %2005 = vst [vmem:[%s173 + $0xbd0] sm:$0xff] %v794
        %2006 = vst [vmem:[%s173 + $0xbd8] sm:$0xff] %v954
        %2007 = vst [vmem:[%s173 + $0xbe0] sm:$0xff] %v1114
        %2008 = vst [vmem:[%s173 + $0xbe8] sm:$0xff] %v1274
        %2009 = vst [vmem:[%s173 + $0xbf0] sm:$0xff] %v1434
        %2010 = vst [vmem:[%s173 + $0xbf8] sm:$0xff] %v1594
        %2011 = vst [vmem:[%s173 + $0xc00] sm:$0xff] %v811
        %2012 = vst [vmem:[%s173 + $0xc08] sm:$0xff] %v971
        %2013 = vst [vmem:[%s173 + $0xc10] sm:$0xff] %v1131
        %2014 = vst [vmem:[%s173 + $0xc18] sm:$0xff] %v1291
        %2015 = vst [vmem:[%s173 + $0xc20] sm:$0xff] %v1451
        %2016 = vst [vmem:[%s173 + $0xc28] sm:$0xff] %v1611
        %2017 = vst [vmem:[%s173 + $0xc30] sm:$0xff] %v812
        %2018 = vst [vmem:[%s173 + $0xc38] sm:$0xff] %v972
        %2019 = vst [vmem:[%s173 + $0xc40] sm:$0xff] %v1132
        %2020 = vst [vmem:[%s173 + $0xc48] sm:$0xff] %v1292
        %2021 = vst [vmem:[%s173 + $0xc50] sm:$0xff] %v1452
        %2022 = vst [vmem:[%s173 + $0xc58] sm:$0xff] %v1612
        %2023 = vst [vmem:[%s173 + $0xc60] sm:$0xff] %v813
        %2024 = vst [vmem:[%s173 + $0xc68] sm:$0xff] %v973
        %2025 = vst [vmem:[%s173 + $0xc70] sm:$0xff] %v1133
        %2026 = vst [vmem:[%s173 + $0xc78] sm:$0xff] %v1293
        %2027 = vst [vmem:[%s173 + $0xc80] sm:$0xff] %v1453
        %2028 = vst [vmem:[%s173 + $0xc88] sm:$0xff] %v1613
        %2029 = vst [vmem:[%s173 + $0xc90] sm:$0xff] %v814
        %2030 = vst [vmem:[%s173 + $0xc98] sm:$0xff] %v974
        %2031 = vst [vmem:[%s173 + $0xca0] sm:$0xff] %v1134
        %2032 = vst [vmem:[%s173 + $0xca8] sm:$0xff] %v1294
        %2033 = vst [vmem:[%s173 + $0xcb0] sm:$0xff] %v1454
        %2034 = vst [vmem:[%s173 + $0xcb8] sm:$0xff] %v1614
        %2035 = vst [vmem:[%s173 + $0xcc0] sm:$0xff] %v815
        %2036 = vst [vmem:[%s173 + $0xcc8] sm:$0xff] %v975
        %2037 = vst [vmem:[%s173 + $0xcd0] sm:$0xff] %v1135
        %2038 = vst [vmem:[%s173 + $0xcd8] sm:$0xff] %v1295
        %2039 = vst [vmem:[%s173 + $0xce0] sm:$0xff] %v1455
        %2040 = vst [vmem:[%s173 + $0xce8] sm:$0xff] %v1615
        %2041 = vst [vmem:[%s173 + $0xcf0] sm:$0xff] %v816
        %2042 = vst [vmem:[%s173 + $0xcf8] sm:$0xff] %v976
        %2043 = vst [vmem:[%s173 + $0xd00] sm:$0xff] %v1136
        %2044 = vst [vmem:[%s173 + $0xd08] sm:$0xff] %v1296
        %2045 = vst [vmem:[%s173 + $0xd10] sm:$0xff] %v1456
        %2046 = vst [vmem:[%s173 + $0xd18] sm:$0xff] %v1616
        %2047 = vst [vmem:[%s173 + $0xd20] sm:$0xff] %v817
        %2048 = vst [vmem:[%s173 + $0xd28] sm:$0xff] %v977
        %2049 = vst [vmem:[%s173 + $0xd30] sm:$0xff] %v1137
        %2050 = vst [vmem:[%s173 + $0xd38] sm:$0xff] %v1297
        %2051 = vst [vmem:[%s173 + $0xd40] sm:$0xff] %v1457
        %2052 = vst [vmem:[%s173 + $0xd48] sm:$0xff] %v1617
        %2053 = vst [vmem:[%s173 + $0xd50] sm:$0xff] %v818
        %2054 = vst [vmem:[%s173 + $0xd58] sm:$0xff] %v978
        %2055 = vst [vmem:[%s173 + $0xd60] sm:$0xff] %v1138
        %2056 = vst [vmem:[%s173 + $0xd68] sm:$0xff] %v1298
        %2057 = vst [vmem:[%s173 + $0xd70] sm:$0xff] %v1458
        %2058 = vst [vmem:[%s173 + $0xd78] sm:$0xff] %v1618
        %2059 = vst [vmem:[%s173 + $0xd80] sm:$0xff] %v819
        %2060 = vst [vmem:[%s173 + $0xd88] sm:$0xff] %v979
        %2061 = vst [vmem:[%s173 + $0xd90] sm:$0xff] %v1139
        %2062 = vst [vmem:[%s173 + $0xd98] sm:$0xff] %v1299
        %2063 = vst [vmem:[%s173 + $0xda0] sm:$0xff] %v1459
        %2064 = vst [vmem:[%s173 + $0xda8] sm:$0xff] %v1619
        %2065 = vst [vmem:[%s173 + $0xdb0] sm:$0xff] %v820
        %2066 = vst [vmem:[%s173 + $0xdb8] sm:$0xff] %v980
        %2067 = vst [vmem:[%s173 + $0xdc0] sm:$0xff] %v1140
        %2068 = vst [vmem:[%s173 + $0xdc8] sm:$0xff] %v1300
        %2069 = vst [vmem:[%s173 + $0xdd0] sm:$0xff] %v1460
        %2070 = vst [vmem:[%s173 + $0xdd8] sm:$0xff] %v1620
        %2071 = vst [vmem:[%s173 + $0xde0] sm:$0xff] %v821
        %2072 = vst [vmem:[%s173 + $0xde8] sm:$0xff] %v981
        %2073 = vst [vmem:[%s173 + $0xdf0] sm:$0xff] %v1141
        %2074 = vst [vmem:[%s173 + $0xdf8] sm:$0xff] %v1301
        %2075 = vst [vmem:[%s173 + $0xe00] sm:$0xff] %v1461
        %2076 = vst [vmem:[%s173 + $0xe08] sm:$0xff] %v1621
        %2077 = vst [vmem:[%s173 + $0xe10] sm:$0xff] %v822
        %2078 = vst [vmem:[%s173 + $0xe18] sm:$0xff] %v982
        %2079 = vst [vmem:[%s173 + $0xe20] sm:$0xff] %v1142
        %2080 = vst [vmem:[%s173 + $0xe28] sm:$0xff] %v1302
        %2081 = vst [vmem:[%s173 + $0xe30] sm:$0xff] %v1462
        %2082 = vst [vmem:[%s173 + $0xe38] sm:$0xff] %v1622
        %2083 = vst [vmem:[%s173 + $0xe40] sm:$0xff] %v823
        %2084 = vst [vmem:[%s173 + $0xe48] sm:$0xff] %v983
        %2085 = vst [vmem:[%s173 + $0xe50] sm:$0xff] %v1143
        %2086 = vst [vmem:[%s173 + $0xe58] sm:$0xff] %v1303
        %2087 = vst [vmem:[%s173 + $0xe60] sm:$0xff] %v1463
        %2088 = vst [vmem:[%s173 + $0xe68] sm:$0xff] %v1623
        %2089 = vst [vmem:[%s173 + $0xe70] sm:$0xff] %v824
        %2090 = vst [vmem:[%s173 + $0xe78] sm:$0xff] %v984
        %2091 = vst [vmem:[%s173 + $0xe80] sm:$0xff] %v1144
        %2092 = vst [vmem:[%s173 + $0xe88] sm:$0xff] %v1304
        %2093 = vst [vmem:[%s173 + $0xe90] sm:$0xff] %v1464
        %2094 = vst [vmem:[%s173 + $0xe98] sm:$0xff] %v1624
        %2095 = vst [vmem:[%s173 + $0xea0] sm:$0xff] %v825
        %2096 = vst [vmem:[%s173 + $0xea8] sm:$0xff] %v985
        %2097 = vst [vmem:[%s173 + $0xeb0] sm:$0xff] %v1145
        %2098 = vst [vmem:[%s173 + $0xeb8] sm:$0xff] %v1305
        %2099 = vst [vmem:[%s173 + $0xec0] sm:$0xff] %v1465
        %2100 = vst [vmem:[%s173 + $0xec8] sm:$0xff] %v1625
        %2101 = vst [vmem:[%s173 + $0xed0] sm:$0xff] %v826
        %2102 = vst [vmem:[%s173 + $0xed8] sm:$0xff] %v986
        %2103 = vst [vmem:[%s173 + $0xee0] sm:$0xff] %v1146
        %2104 = vst [vmem:[%s173 + $0xee8] sm:$0xff] %v1306
        %2105 = vst [vmem:[%s173 + $0xef0] sm:$0xff] %v1466
        %2106 = vst [vmem:[%s173 + $0xef8] sm:$0xff] %v1626
        %s2107 = sand.u32 %s79, 1
        %s2108 = scalar_lea.sflag [#allocation4], %s2107
        %s2109 = sand.u32 %s79, 1
        %s2110 = smul.addr %s2109, 3840
        %s2111 = scalar_lea.vmem [#allocation5], %s2110
        // Predicated region
        $region29: #{tpu_custom_call.1} parent=23 // pred_check
          %p2112 = pneg %p89
        $region30: #{tpu_custom_call.1} parent=23 // pred_check_branch
          %2114 = sbr.rel (%p2112) target = $region32
        $region31: #{tpu_custom_call.1} parent=23 // pred_region
          %s2115 = smul.u32 80, %s24
          %s2116 = smul.u32 6, %s25
          %s2117 = ssub.s32 8, %s2116
          %p2118 = scmp.lt.s32.totalorder %s2117, 6
          %s2119 = scalar_select %p2118, %s2117, 6
          %s2120 = smul.u32 10240, %s2119
          %s2122 = ssub.s32 61440, %s2120
          %2123 = vsyncadd %s2108, %s2122
          %p2124 = scmp.ne.s32.totalorder 0, %s2120
          %s2125 = smul.addr %s2115, 8
          %s2126 = sadd.s32 %s2116, %s2125
          %s2127 = smul.addr %s23, 640
          %s2128 = sadd.s32 %s2126, %s2127
          %s2129 = smul.addr %s2128, 128
          %s2130 = scalar_lea.hbm %s1, %s2129
          %s2131 = smul.u32 %s2119, 8
          %s2132 = smul.u32 %s2131, 80
          %s2133 = sshll.u32 %s2111, 4
          %s2134 = int_to_ptr.vmem [resolvable:$true] %s2133
          %s2135 = sshll.u32 %s2132, 4
          %2139 = dma.vmem_to_hbm [thread:$0]  (%p2124), %s2134, %s2135, %s2130, %s2108, 768, 1024, %s2131
        $region32: #{tpu_custom_call.1} parent=23 // pred_fallthru
          _
      $region24: #{tpu_custom_call.1} parent=5 // pred_fallthru
        _
      %p2140 = scmp.le.s32.totalorder 2, %s13
      // Predicated region
      $region33: #{tpu_custom_call.1} parent=5 // pred_check
        %p2141 = pneg %p2140
      $region34: #{tpu_custom_call.1} parent=5 // pred_check_branch
        %2143 = sbr.rel (%p2141) target = $region36
      $region35: #{tpu_custom_call.1} parent=5 // pred_region
        %s2144 = ssub.s32 %s13, 2
        // Predicated region
        $region37: #{tpu_custom_call.1} parent=35 // pred_check
          %p2145 = pneg %p95
        $region38: #{tpu_custom_call.1} parent=35 // pred_check_branch
          %2147 = sbr.rel (%p2145) target = $region40
        $region39: #{tpu_custom_call.1} parent=35 // pred_region
          %s2148 = sand.u32 %s80, 1
          %s2149 = scalar_lea.sflag [#allocation4], %s2148
          %s2150 = sand.u32 %s80, 1
          %s2151 = smul.addr %s2150, 3840
          %s2152 = scalar_lea.vmem [#allocation5], %s2151
          %2153 = dma.done %s2149, 61440
        $region40: #{tpu_custom_call.1} parent=35 // pred_fallthru
          _
      $region36: #{tpu_custom_call.1} parent=5 // pred_fallthru
        _
    $region6: #{tpu_custom_call.1} parent=1 // loop_footer
      %s17 = sadd.s32 1, %s13
    $region7: #{tpu_custom_call.1} parent=1 // loop_footer_branch
      %12 = sbr.rel target = $region3
    $region8: #{tpu_custom_call.1} parent=1 // loop_exit
      _
    %2154 = vsyncpa [#allocation3], 1
    %s2155 = scalar_lea.sflag [#allocation3], 1
    %2156 = vsyncpa %s2155, 1
    %2157 = vsyncpa [#allocation4], 1
    %s2158 = scalar_lea.sflag [#allocation4], 1
    %2159 = vsyncpa %s2158, 1

</llo_original>
